<compile_context>
chip_gen: v5e
topology: v5e:2x2
jax: 0.10.0
libtpu: 0.0.40
codegen_flags: <defaults>
</compile_context>

<pallas_src>
import functools

import jax
import jax.numpy as jnp
from jax import lax
from jax.experimental import pallas as pl
from jax.experimental.pallas import tpu as pltpu


def _round_up(x, m):
    return ((x + m - 1) // m) * m


# -----------------------------------------------------------------------------
# Fused GRU kernel: per grid step, one block-wide input projection + t_blk
# unrolled recurrence steps.
# -----------------------------------------------------------------------------
def _gru_fused_kernel(emb_ref, wih_ref, bgi_ref, whh_ref, bhn_ref,
                      hs_ref, hfin_ref, h_scr, *, t_blk, seq_len):
    t = pl.program_id(1)

    @pl.when(t == 0)
    def _():
        h_scr[...] = jnp.zeros_like(h_scr)

    Hp = whh_ref.shape[0]
    B_shard, _ = h_scr.shape

    # ---- fused input projection for the whole time block: ONE MXU matmul ----
    x = emb_ref[...].reshape(t_blk * B_shard, emb_ref.shape[-1])
    gi_blk = (jnp.dot(x, wih_ref[...], preferred_element_type=jnp.float32)
              + bgi_ref[...])                              # (t_blk*B_shard, 3Hp)
    gi_blk = gi_blk.reshape(t_blk, B_shard, 3 * Hp)

    whh = whh_ref[...]                                     # (Hp, 3Hp), loop-invariant
    whh_rz = whh[:, :2 * Hp]
    whh_n = whh[:, 2 * Hp:]
    b_hn = jnp.broadcast_to(bhn_ref[...], (B_shard, Hp))   # hoisted broadcast
    h = h_scr[...]

    ragged = (seq_len % t_blk) != 0
    base = t * t_blk

    # Static Python loop == fully unrolled; all ref indices are compile-time consts.
    for s in range(t_blk):
        gi = gi_blk[s]                                     # (B_shard, 3Hp), precomputed
        # r/z matmul first so the EUP sigmoids overlap the n-part MXU pushes.
        gh_rz = jnp.dot(h, whh_rz, preferred_element_type=jnp.float32)
        r = jax.nn.sigmoid(gi[:, :Hp] + gh_rz[:, :Hp])
        z = jax.nn.sigmoid(gi[:, Hp:2 * Hp] + gh_rz[:, Hp:])
        gh_n = jnp.dot(h, whh_n, preferred_element_type=jnp.float32)
        n = jnp.tanh(gi[:, 2 * Hp:] + r * (gh_n + b_hn))
        h_new = (1.0 - z) * n + z * h
        if ragged:
            # Freeze the state on padded tail steps so the final h is correct.
            h_new = jnp.where(base + s < seq_len, h_new, h)
        hs_ref[s] = h_new                                  # dense time-major plane store
        h = h_new

    h_scr[...] = h

    @pl.when(t == pl.num_programs(1) - 1)
    def _():
        hfin_ref[...] = h                                  # single final-state write


def gru_fused_pallas(emb, w_ih_t, b_gi, w_hh_t, b_hn, *,
                     t_blk, batch_shards, seq_len):
    """emb: (T_pad, B_pad, E) f32 time-major.
    Returns hs time-major (T_pad, B_pad, Hp) and final hidden (B_pad, Hp)."""
    T_pad, B_pad, E = emb.shape
    Hp, G = w_hh_t.shape
    assert G == 3 * Hp
    assert B_pad % batch_shards == 0
    B_shard = B_pad // batch_shards
    assert B_shard % 8 == 0, "per-shard batch must be sublane (8) aligned"
    assert T_pad % t_blk == 0
    n_t = T_pad // t_blk
    # NOTE: time MUST be the last (innermost, in-order, "arbitrary") grid axis —
    # the carried h_scr reset at t==0 relies on it.  Batch shards are independent
    # ("parallel"); scratch is per-core, so megacore sharding is safe.

    kernel = functools.partial(_gru_fused_kernel, t_blk=t_blk, seq_len=seq_len)

    f32 = 4
    need = (2 * t_blk * B_shard * E * f32            # emb in (double-buffered)
            + (E * G + G + Hp * G + Hp) * f32        # weights/biases (single-buffered)
            + 2 * t_blk * B_shard * Hp * f32         # hs out (double-buffered)
            + 2 * B_shard * Hp * f32                 # final h out
            + B_shard * Hp * f32)                    # carried-state scratch
    # Explicit budget instead of the per-generation scoped default; clamp to the
    # v7x physical 64 MiB so one setting is safe on v5e/v6e/v7x.
    vmem_limit = int(min(max(2 * need, 32 * 1024 * 1024), 64 * 1024 * 1024))

    cost = pl.CostEstimate(
        flops=(2 * T_pad * B_pad * E * G             # fused input projection
               + 2 * T_pad * B_pad * Hp * G          # recurrent matmuls
               + 12 * T_pad * B_pad * Hp),           # gate elementwise
        transcendentals=3 * T_pad * B_pad * Hp,      # 2 sigmoid + 1 tanh per step
        bytes_accessed=f32 * (T_pad * B_pad * (E + Hp) + B_pad * Hp
                              + (E + Hp) * G + G + Hp),
    )

    resident = pl.Buffered(1)   # loop-invariant operands: no double-buffering

    hs_tm, h_fin = pl.pallas_call(
        kernel,
        out_shape=(
            jax.ShapeDtypeStruct((T_pad, B_pad, Hp), jnp.float32),   # hs, time-major
            jax.ShapeDtypeStruct((B_pad, Hp), jnp.float32),          # final hidden
        ),
        grid_spec=pltpu.PrefetchScalarGridSpec(
            num_scalar_prefetch=0,
            grid=(batch_shards, n_t),
            in_specs=[
                pl.BlockSpec((t_blk, B_shard, E), lambda b, t: (t, b, 0)),   # emb block
                pl.BlockSpec((E, G), lambda b, t: (0, 0), pipeline_mode=resident),   # W_ih^T
                pl.BlockSpec((1, G), lambda b, t: (0, 0), pipeline_mode=resident),   # b_gi
                pl.BlockSpec((Hp, G), lambda b, t: (0, 0), pipeline_mode=resident),  # W_hh^T
                pl.BlockSpec((1, Hp), lambda b, t: (0, 0), pipeline_mode=resident),  # b_hn
            ],
            out_specs=[
                pl.BlockSpec((t_blk, B_shard, Hp), lambda b, t: (t, b, 0)),
                pl.BlockSpec((B_shard, Hp), lambda b, t: (b, 0)),
            ],
            scratch_shapes=[pltpu.VMEM((B_shard, Hp), jnp.float32)],  # carried hidden state
        ),
        compiler_params=pltpu.CompilerParams(
            dimension_semantics=("parallel", "arbitrary"),
            vmem_limit_bytes=vmem_limit,
        ),
        cost_estimate=cost,
    )(emb, w_ih_t, b_gi, w_hh_t, b_hn)
    return hs_tm, h_fin


# -----------------------------------------------------------------------------
# Parameter packing: pad H -> H_pad (lane-dense), fold biases, transpose weights.
# Done ONCE, outside the per-call forward.
# -----------------------------------------------------------------------------
def pack_params(params):
    emb = params["embedding"]            # (V, E)
    w_ih = params["w_ih"]                # (3H, E)   -- nn.GRU weight_ih_l0
    w_hh = params["w_hh"]                # (3H, H)   -- nn.GRU weight_hh_l0
    b_ih = params["b_ih"]                # (3H,)
    b_hh = params["b_hh"]                # (3H,)
    H = w_hh.shape[1]
    Hp = _round_up(H, 128)               # lane-dense hidden dim
    G = 3 * Hp

    def pad_gate_cols(w_t):              # (rows, 3H) -> (rows, 3H_pad), gate-blocked
        rows = w_t.shape[0]
        out = jnp.zeros((rows, G), jnp.float32)
        for g in range(3):
            out = out.at[:, g * Hp:g * Hp + H].set(w_t[:, g * H:(g + 1) * H])
        return out

    w_ih_t = pad_gate_cols(w_ih.T)                                   # (E, 3H_pad)
    w_hh_t = jnp.zeros((Hp, G), jnp.float32).at[:H].set(pad_gate_cols(w_hh.T))

    # Fold b_ih + (b_hr, b_hz) into the fused projection bias; keep b_hn separate
    # because it is multiplied by r inside the recurrence (PyTorch GRU semantics).
    b_fold = jnp.concatenate(
        [b_ih[:H] + b_hh[:H], b_ih[H:2 * H] + b_hh[H:2 * H], b_ih[2 * H:]]
    )
    b_gi = pad_gate_cols(b_fold[None, :])                            # (1, 3H_pad)
    b_hn = jnp.zeros((1, Hp), jnp.float32).at[0, :H].set(b_hh[2 * H:])

    return {"embedding": emb, "w_ih_t": w_ih_t, "w_hh_t": w_hh_t,
            "b_gi": b_gi, "b_hn": b_hn}


# -----------------------------------------------------------------------------
# Encoder forward (matches nn.GRU(batch_first=True): returns hs (B,T,H), h (1,B,H)).
# -----------------------------------------------------------------------------
def encoder_forward(packed, sequence, *, hidden_dim, t_blk=None, batch_shards=1):
    emb_table = packed["embedding"]
    w_ih_t, w_hh_t = packed["w_ih_t"], packed["w_hh_t"]
    b_gi, b_hn = packed["b_gi"], packed["b_hn"]

    B, T = sequence.shape
    Hp = w_hh_t.shape[0]
    H = hidden_dim

    # Per-generation guidance: batch_shards=1 on v5e/v6e (single TensorCore);
    # batch_shards=2 on v7x only when the padded batch is >= 16.
    B_shard = _round_up(-(-B // batch_shards), 8)       # sublane-padded per-shard batch
    B_pad = B_shard * batch_shards

    if t_blk is None:
        # vreg-pressure heuristic: each unrolled step keeps a few
        # (B_shard/8)*(Hp/128)-vreg values live; cap the unroll when the live set
        # is large, raise it for small footprints to amortize ~0.35us/grid-step.
        live = (B_shard // 8) * (Hp // 128)
        t_blk = 32 if live <= 1 else (16 if live <= 4 else 8)
    t_blk = min(t_blk, _round_up(T, 8))
    T_pad = _round_up(T, t_blk)

    # Embedding lookup (data-dependent gather, left to XLA): transpose the tiny
    # int32 id matrix BEFORE the gather so the embedded tensor lands time-major
    # directly — no HBM transpose of the embedded tensor.
    # TODO(synk): the embedding gather itself has no clean dense-BlockSpec Pallas
    # equivalent at this size; done with jnp.take outside the kernel.
    seq_tb = jnp.transpose(sequence)                    # (T, B) int32
    emb = jnp.take(emb_table, seq_tb, axis=0)           # (T, B, E) f32
    emb = jnp.pad(emb, ((0, T_pad - T), (0, B_pad - B), (0, 0)))

    hs_tm, h_pad = gru_fused_pallas(emb, w_ih_t, b_gi, w_hh_t, b_hn,
                                    t_blk=t_blk, batch_shards=batch_shards,
                                    seq_len=T)

    # One amortized relayout to batch-first, outside the kernel.
    hs = jnp.transpose(hs_tm[:T, :B, :H], (1, 0, 2))    # (B, T, H)
    h = h_pad[:B, :H][None, :, :]                       # (1, B, H)
    return hs, h


# -----------------------------------------------------------------------------
# Pure-JAX reference (lax.scan, PyTorch GRU semantics) for correctness checking.
# -----------------------------------------------------------------------------
def encoder_reference(params, sequence):
    emb_table = params["embedding"]
    embedding = jnp.take(emb_table, sequence, axis=0)   # (B, T, E)
    w_ih_t, w_hh_t = params["w_ih"].T, params["w_hh"].T
    b_ih, b_hh = params["b_ih"], params["b_hh"]
    H = params["w_hh"].shape[1]
    B = sequence.shape[0]

    def step(h_prev, x_t):
        gi = x_t @ w_ih_t + b_ih
        gh = h_prev @ w_hh_t + b_hh
        i_r, i_z, i_n = gi[:, :H], gi[:, H:2 * H], gi[:, 2 * H:]
        h_r, h_z, h_n = gh[:, :H], gh[:, H:2 * H], gh[:, 2 * H:]
        r = jax.nn.sigmoid(i_r + h_r)
        z = jax.nn.sigmoid(i_z + h_z)
        n = jnp.tanh(i_n + r * h_n)
        h_new = (1.0 - z) * n + z * h_prev
        return h_new, h_new

    h0 = jnp.zeros((B, H), jnp.float32)
    h_last, hs_tbh = lax.scan(step, h0, jnp.transpose(embedding, (1, 0, 2)))
    return jnp.transpose(hs_tbh, (1, 0, 2)), h_last[None]


# -----------------------------------------------------------------------------
# Deterministic parameter construction (shapes per nn.Embedding / nn.GRU).
# -----------------------------------------------------------------------------
def make_params(key, vocab_size, embedding_dim, hidden_dim, padding_idx=0):
    k_emb, k_wih, k_whh, k_bih, k_bhh = jax.random.split(key, 5)
    emb = jax.random.normal(k_emb, (vocab_size, embedding_dim), jnp.float32) * 0.1
    emb = emb.at[padding_idx].set(0.0)                  # padding_idx=char2id[' ']
    w_ih = jax.random.normal(k_wih, (3 * hidden_dim, embedding_dim), jnp.float32) * 0.1
    w_hh = jax.random.normal(k_whh, (3 * hidden_dim, hidden_dim), jnp.float32) * 0.1
    b_ih = jax.random.normal(k_bih, (3 * hidden_dim,), jnp.float32) * 0.1
    b_hh = jax.random.normal(k_bhh, (3 * hidden_dim,), jnp.float32) * 0.1
    return {"embedding": emb, "w_ih": w_ih, "w_hh": w_hh, "b_ih": b_ih, "b_hh": b_hh}


if __name__ == "__main__":
    VOCAB, EMB, HID = 20, 16, 32
    B, T = 2, 8
    PAD_IDX = 0   # stands in for char2id[' ']

    key = jax.random.PRNGKey(0)
    k_params, k_seq = jax.random.split(key)
    params = make_params(k_params, VOCAB, EMB, HID, padding_idx=PAD_IDX)
    sequence = jax.random.randint(k_seq, (B, T), 0, VOCAB, dtype=jnp.int32)

    packed = pack_params(params)
    # batch_shards=1 on v5e/v6e; set batch_shards=2 on v7x when padded B >= 16.
    fwd = jax.jit(functools.partial(encoder_forward, hidden_dim=HID,
                                    batch_shards=1))
    hs, h = fwd(packed, sequence)
    hs = jax.block_until_ready(hs)
    h = jax.block_until_ready(h)

    hs_ref, h_ref = encoder_reference(params, sequence)
    assert hs.shape == (B, T, HID) and h.shape == (1, B, HID)
    assert jnp.allclose(hs, hs_ref, atol=1e-5, rtol=1e-5)
    assert jnp.allclose(h, h_ref, atol=1e-5, rtol=1e-5)

    print("KERNEL_OK")
</pallas_src>

<mosaic_0001>
module attributes {stable_mosaic.version = 11 : i64} {
  func.func @_gru_fused_kernel(%arg0: i32, %arg1: i32, %arg2: memref<8x8x16xf32, #tpu.memory_space<vmem>>, %arg3: memref<16x384xf32, #tpu.memory_space<vmem>>, %arg4: memref<1x384xf32, #tpu.memory_space<vmem>>, %arg5: memref<128x384xf32, #tpu.memory_space<vmem>>, %arg6: memref<1x128xf32, #tpu.memory_space<vmem>>, %arg7: memref<8x8x128xf32, #tpu.memory_space<vmem>>, %arg8: memref<8x128xf32, #tpu.memory_space<vmem>>, %arg9: memref<8x128xf32, #tpu.memory_space<vmem>>) attributes {dimension_semantics = [#tpu.dimension_semantics<parallel>, #tpu.dimension_semantics<arbitrary>], iteration_bounds = array<i64: 1, 1>, scalar_prefetch = 0 : i64, scratch_operands = 1 : i64, tpu.core_type = #tpu.core_type<tc>, window_params = [{transform_indices = @transform_0, window_bounds = array<i64: 8, 8, 16>}, {pipeline_mode = #tpu.pipeline_mode<synchronous>, transform_indices = @transform_1, window_bounds = array<i64: 16, 384>}, {pipeline_mode = #tpu.pipeline_mode<synchronous>, transform_indices = @transform_2, window_bounds = array<i64: 1, 384>}, {pipeline_mode = #tpu.pipeline_mode<synchronous>, transform_indices = @transform_3, window_bounds = array<i64: 128, 384>}, {pipeline_mode = #tpu.pipeline_mode<synchronous>, transform_indices = @transform_4, window_bounds = array<i64: 1, 128>}, {transform_indices = @transform_5, window_bounds = array<i64: 8, 8, 128>}, {transform_indices = @transform_6, window_bounds = array<i64: 8, 128>}]} {
    %c0_i32 = arith.constant 0 : i32
    %0 = arith.cmpi eq, %arg1, %c0_i32 : i32
    %1 = arith.extui %0 : i1 to i32
    %c0_i32_0 = arith.constant 0 : i32
    %2 = arith.cmpi ne, %1, %c0_i32_0 : i32
    scf.if %2 {
      %cst_74 = arith.constant 0.000000e+00 : f32
      %286 = vector.broadcast %cst_74 : f32 to vector<8x128xf32>
      %c0_75 = arith.constant 0 : index
      %c0_76 = arith.constant 0 : index
      %287 = vector.load %arg9[%c0_75, %c0_76] : memref<8x128xf32, #tpu.memory_space<vmem>>, vector<8x128xf32>
      tpu.vector_store %arg9[%c0_75, %c0_76], %286 {strides = array<i32>} : memref<8x128xf32, #tpu.memory_space<vmem>>, vector<8x128xf32>,
    } else {
    }
    %c0 = arith.constant 0 : index
    %c0_1 = arith.constant 0 : index
    %c0_2 = arith.constant 0 : index
    %3 = vector.load %arg2[%c0, %c0_1, %c0_2] : memref<8x8x16xf32, #tpu.memory_space<vmem>>, vector<8x8x16xf32>
    %4 = vector.shape_cast %3 : vector<8x8x16xf32> to vector<64x16xf32>
    %c0_3 = arith.constant 0 : index
    %c0_4 = arith.constant 0 : index
    %5 = vector.load %arg3[%c0_3, %c0_4] : memref<16x384xf32, #tpu.memory_space<vmem>>, vector<16x384xf32>
    %cst = arith.constant dense<0.000000e+00> : vector<64x384xf32>
    %6 = tpu.matmul %4, %5, %cst {dimension_numbers = #tpu.dot_dimension_numbers<[1], [0], [0], [1], [0, 0, 1, 1], [], []>} : vector<64x16xf32>, vector<16x384xf32>, vector<64x384xf32> -> vector<64x384xf32>
    %c0_5 = arith.constant 0 : index
    %c0_6 = arith.constant 0 : index
    %7 = vector.load %arg4[%c0_5, %c0_6] : memref<1x384xf32, #tpu.memory_space<vmem>>, vector<1x384xf32>
    %8 = vector.broadcast %7 : vector<1x384xf32> to vector<64x384xf32>
    %9 = arith.addf %6, %8 : vector<64x384xf32>
    %10 = vector.shape_cast %9 : vector<64x384xf32> to vector<8x8x384xf32>
    %c0_7 = arith.constant 0 : index
    %c0_8 = arith.constant 0 : index
    %11 = vector.load %arg5[%c0_7, %c0_8] : memref<128x384xf32, #tpu.memory_space<vmem>>, vector<128x384xf32>
    %12 = vector.extract_strided_slice %11 {offsets = [0, 0], sizes = [128, 256], strides = [1, 1]} : vector<128x384xf32> to vector<128x256xf32>
    %13 = vector.extract_strided_slice %11 {offsets = [0, 256], sizes = [128, 128], strides = [1, 1]} : vector<128x384xf32> to vector<128x128xf32>
    %c0_9 = arith.constant 0 : index
    %c0_10 = arith.constant 0 : index
    %14 = vector.load %arg6[%c0_9, %c0_10] : memref<1x128xf32, #tpu.memory_space<vmem>>, vector<1x128xf32>
    %15 = vector.shape_cast %14 : vector<1x128xf32> to vector<1x128xf32>
    %16 = vector.broadcast %15 : vector<1x128xf32> to vector<8x128xf32>
    %c0_11 = arith.constant 0 : index
    %c0_12 = arith.constant 0 : index
    %17 = vector.load %arg9[%c0_11, %c0_12] : memref<8x128xf32, #tpu.memory_space<vmem>>, vector<8x128xf32>
    %18 = vector.extract_strided_slice %10 {offsets = [0, 0, 0], sizes = [1, 8, 384], strides = [1, 1, 1]} : vector<8x8x384xf32> to vector<1x8x384xf32>
    %19 = vector.shape_cast %18 : vector<1x8x384xf32> to vector<8x384xf32>
    %cst_13 = arith.constant dense<0.000000e+00> : vector<8x256xf32>
    %20 = tpu.matmul %17, %12, %cst_13 {dimension_numbers = #tpu.dot_dimension_numbers<[1], [0], [0], [1], [0, 0, 1, 1], [], []>} : vector<8x128xf32>, vector<128x256xf32>, vector<8x256xf32> -> vector<8x256xf32>
    %21 = vector.extract_strided_slice %19 {offsets = [0, 0], sizes = [8, 128], strides = [1, 1]} : vector<8x384xf32> to vector<8x128xf32>
    %22 = vector.extract_strided_slice %20 {offsets = [0, 0], sizes = [8, 128], strides = [1, 1]} : vector<8x256xf32> to vector<8x128xf32>
    %23 = arith.addf %21, %22 : vector<8x128xf32>
    %24 = arith.negf %23 : vector<8x128xf32>
    %25 = math.exp %24 : vector<8x128xf32>
    %cst_14 = arith.constant 1.000000e+00 : f32
    %26 = vector.broadcast %cst_14 : f32 to vector<8x128xf32>
    %27 = arith.addf %26, %25 : vector<8x128xf32>
    %28 = arith.divf %26, %27 : vector<8x128xf32>
    %29 = vector.extract_strided_slice %19 {offsets = [0, 128], sizes = [8, 128], strides = [1, 1]} : vector<8x384xf32> to vector<8x128xf32>
    %30 = vector.extract_strided_slice %20 {offsets = [0, 128], sizes = [8, 128], strides = [1, 1]} : vector<8x256xf32> to vector<8x128xf32>
    %31 = arith.addf %29, %30 : vector<8x128xf32>
    %32 = arith.negf %31 : vector<8x128xf32>
    %33 = math.exp %32 : vector<8x128xf32>
    %cst_15 = arith.constant 1.000000e+00 : f32
    %34 = vector.broadcast %cst_15 : f32 to vector<8x128xf32>
    %35 = arith.addf %34, %33 : vector<8x128xf32>
    %36 = arith.divf %34, %35 : vector<8x128xf32>
    %cst_16 = arith.constant dense<0.000000e+00> : vector<8x128xf32>
    %37 = tpu.matmul %17, %13, %cst_16 {dimension_numbers = #tpu.dot_dimension_numbers<[1], [0], [0], [1], [0, 0, 1, 1], [], []>} : vector<8x128xf32>, vector<128x128xf32>, vector<8x128xf32> -> vector<8x128xf32>
    %38 = vector.extract_strided_slice %19 {offsets = [0, 256], sizes = [8, 128], strides = [1, 1]} : vector<8x384xf32> to vector<8x128xf32>
    %39 = arith.addf %37, %16 : vector<8x128xf32>
    %40 = arith.mulf %28, %39 : vector<8x128xf32>
    %41 = arith.addf %38, %40 : vector<8x128xf32>
    %42 = math.tanh %41 : vector<8x128xf32>
    %cst_17 = arith.constant 1.000000e+00 : f32
    %43 = vector.broadcast %cst_17 : f32 to vector<8x128xf32>
    %44 = arith.subf %43, %36 : vector<8x128xf32>
    %45 = arith.mulf %44, %42 : vector<8x128xf32>
    %46 = arith.mulf %36, %17 : vector<8x128xf32>
    %47 = arith.addf %45, %46 : vector<8x128xf32>
    %c0_18 = arith.constant 0 : index
    %c0_19 = arith.constant 0 : index
    %c0_20 = arith.constant 0 : index
    %48 = vector.load %arg7[%c0_18, %c0_19, %c0_20] : memref<8x8x128xf32, #tpu.memory_space<vmem>>, vector<1x8x128xf32>
    %49 = vector.shape_cast %48 : vector<1x8x128xf32> to vector<8x128xf32>
    %50 = vector.shape_cast %47 : vector<8x128xf32> to vector<1x8x128xf32>
    tpu.vector_store %arg7[%c0_18, %c0_19, %c0_20], %50 {strides = array<i32>} : memref<8x8x128xf32, #tpu.memory_space<vmem>>, vector<1x8x128xf32>,
    %51 = vector.extract_strided_slice %10 {offsets = [1, 0, 0], sizes = [1, 8, 384], strides = [1, 1, 1]} : vector<8x8x384xf32> to vector<1x8x384xf32>
    %52 = vector.shape_cast %51 : vector<1x8x384xf32> to vector<8x384xf32>
    %cst_21 = arith.constant dense<0.000000e+00> : vector<8x256xf32>
    %53 = tpu.matmul %47, %12, %cst_21 {dimension_numbers = #tpu.dot_dimension_numbers<[1], [0], [0], [1], [0, 0, 1, 1], [], []>} : vector<8x128xf32>, vector<128x256xf32>, vector<8x256xf32> -> vector<8x256xf32>
    %54 = vector.extract_strided_slice %52 {offsets = [0, 0], sizes = [8, 128], strides = [1, 1]} : vector<8x384xf32> to vector<8x128xf32>
    %55 = vector.extract_strided_slice %53 {offsets = [0, 0], sizes = [8, 128], strides = [1, 1]} : vector<8x256xf32> to vector<8x128xf32>
    %56 = arith.addf %54, %55 : vector<8x128xf32>
    %57 = arith.negf %56 : vector<8x128xf32>
    %58 = math.exp %57 : vector<8x128xf32>
    %cst_22 = arith.constant 1.000000e+00 : f32
    %59 = vector.broadcast %cst_22 : f32 to vector<8x128xf32>
    %60 = arith.addf %59, %58 : vector<8x128xf32>
    %61 = arith.divf %59, %60 : vector<8x128xf32>
    %62 = vector.extract_strided_slice %52 {offsets = [0, 128], sizes = [8, 128], strides = [1, 1]} : vector<8x384xf32> to vector<8x128xf32>
    %63 = vector.extract_strided_slice %53 {offsets = [0, 128], sizes = [8, 128], strides = [1, 1]} : vector<8x256xf32> to vector<8x128xf32>
    %64 = arith.addf %62, %63 : vector<8x128xf32>
    %65 = arith.negf %64 : vector<8x128xf32>
    %66 = math.exp %65 : vector<8x128xf32>
    %cst_23 = arith.constant 1.000000e+00 : f32
    %67 = vector.broadcast %cst_23 : f32 to vector<8x128xf32>
    %68 = arith.addf %67, %66 : vector<8x128xf32>
    %69 = arith.divf %67, %68 : vector<8x128xf32>
    %cst_24 = arith.constant dense<0.000000e+00> : vector<8x128xf32>
    %70 = tpu.matmul %47, %13, %cst_24 {dimension_numbers = #tpu.dot_dimension_numbers<[1], [0], [0], [1], [0, 0, 1, 1], [], []>} : vector<8x128xf32>, vector<128x128xf32>, vector<8x128xf32> -> vector<8x128xf32>
    %71 = vector.extract_strided_slice %52 {offsets = [0, 256], sizes = [8, 128], strides = [1, 1]} : vector<8x384xf32> to vector<8x128xf32>
    %72 = arith.addf %70, %16 : vector<8x128xf32>
    %73 = arith.mulf %61, %72 : vector<8x128xf32>
    %74 = arith.addf %71, %73 : vector<8x128xf32>
    %75 = math.tanh %74 : vector<8x128xf32>
    %cst_25 = arith.constant 1.000000e+00 : f32
    %76 = vector.broadcast %cst_25 : f32 to vector<8x128xf32>
    %77 = arith.subf %76, %69 : vector<8x128xf32>
    %78 = arith.mulf %77, %75 : vector<8x128xf32>
    %79 = arith.mulf %69, %47 : vector<8x128xf32>
    %80 = arith.addf %78, %79 : vector<8x128xf32>
    %c1 = arith.constant 1 : index
    %c0_26 = arith.constant 0 : index
    %c0_27 = arith.constant 0 : index
    %81 = vector.load %arg7[%c1, %c0_26, %c0_27] : memref<8x8x128xf32, #tpu.memory_space<vmem>>, vector<1x8x128xf32>
    %82 = vector.shape_cast %81 : vector<1x8x128xf32> to vector<8x128xf32>
    %83 = vector.shape_cast %80 : vector<8x128xf32> to vector<1x8x128xf32>
    tpu.vector_store %arg7[%c1, %c0_26, %c0_27], %83 {strides = array<i32>} : memref<8x8x128xf32, #tpu.memory_space<vmem>>, vector<1x8x128xf32>,
    %84 = vector.extract_strided_slice %10 {offsets = [2, 0, 0], sizes = [1, 8, 384], strides = [1, 1, 1]} : vector<8x8x384xf32> to vector<1x8x384xf32>
    %85 = vector.shape_cast %84 : vector<1x8x384xf32> to vector<8x384xf32>
    %cst_28 = arith.constant dense<0.000000e+00> : vector<8x256xf32>
    %86 = tpu.matmul %80, %12, %cst_28 {dimension_numbers = #tpu.dot_dimension_numbers<[1], [0], [0], [1], [0, 0, 1, 1], [], []>} : vector<8x128xf32>, vector<128x256xf32>, vector<8x256xf32> -> vector<8x256xf32>
    %87 = vector.extract_strided_slice %85 {offsets = [0, 0], sizes = [8, 128], strides = [1, 1]} : vector<8x384xf32> to vector<8x128xf32>
    %88 = vector.extract_strided_slice %86 {offsets = [0, 0], sizes = [8, 128], strides = [1, 1]} : vector<8x256xf32> to vector<8x128xf32>
    %89 = arith.addf %87, %88 : vector<8x128xf32>
    %90 = arith.negf %89 : vector<8x128xf32>
    %91 = math.exp %90 : vector<8x128xf32>
    %cst_29 = arith.constant 1.000000e+00 : f32
    %92 = vector.broadcast %cst_29 : f32 to vector<8x128xf32>
    %93 = arith.addf %92, %91 : vector<8x128xf32>
    %94 = arith.divf %92, %93 : vector<8x128xf32>
    %95 = vector.extract_strided_slice %85 {offsets = [0, 128], sizes = [8, 128], strides = [1, 1]} : vector<8x384xf32> to vector<8x128xf32>
    %96 = vector.extract_strided_slice %86 {offsets = [0, 128], sizes = [8, 128], strides = [1, 1]} : vector<8x256xf32> to vector<8x128xf32>
    %97 = arith.addf %95, %96 : vector<8x128xf32>
    %98 = arith.negf %97 : vector<8x128xf32>
    %99 = math.exp %98 : vector<8x128xf32>
    %cst_30 = arith.constant 1.000000e+00 : f32
    %100 = vector.broadcast %cst_30 : f32 to vector<8x128xf32>
    %101 = arith.addf %100, %99 : vector<8x128xf32>
    %102 = arith.divf %100, %101 : vector<8x128xf32>
    %cst_31 = arith.constant dense<0.000000e+00> : vector<8x128xf32>
    %103 = tpu.matmul %80, %13, %cst_31 {dimension_numbers = #tpu.dot_dimension_numbers<[1], [0], [0], [1], [0, 0, 1, 1], [], []>} : vector<8x128xf32>, vector<128x128xf32>, vector<8x128xf32> -> vector<8x128xf32>
    %104 = vector.extract_strided_slice %85 {offsets = [0, 256], sizes = [8, 128], strides = [1, 1]} : vector<8x384xf32> to vector<8x128xf32>
    %105 = arith.addf %103, %16 : vector<8x128xf32>
    %106 = arith.mulf %94, %105 : vector<8x128xf32>
    %107 = arith.addf %104, %106 : vector<8x128xf32>
    %108 = math.tanh %107 : vector<8x128xf32>
    %cst_32 = arith.constant 1.000000e+00 : f32
    %109 = vector.broadcast %cst_32 : f32 to vector<8x128xf32>
    %110 = arith.subf %109, %102 : vector<8x128xf32>
    %111 = arith.mulf %110, %108 : vector<8x128xf32>
    %112 = arith.mulf %102, %80 : vector<8x128xf32>
    %113 = arith.addf %111, %112 : vector<8x128xf32>
    %c2 = arith.constant 2 : index
    %c0_33 = arith.constant 0 : index
    %c0_34 = arith.constant 0 : index
    %114 = vector.load %arg7[%c2, %c0_33, %c0_34] : memref<8x8x128xf32, #tpu.memory_space<vmem>>, vector<1x8x128xf32>
    %115 = vector.shape_cast %114 : vector<1x8x128xf32> to vector<8x128xf32>
    %116 = vector.shape_cast %113 : vector<8x128xf32> to vector<1x8x128xf32>
    tpu.vector_store %arg7[%c2, %c0_33, %c0_34], %116 {strides = array<i32>} : memref<8x8x128xf32, #tpu.memory_space<vmem>>, vector<1x8x128xf32>,
    %117 = vector.extract_strided_slice %10 {offsets = [3, 0, 0], sizes = [1, 8, 384], strides = [1, 1, 1]} : vector<8x8x384xf32> to vector<1x8x384xf32>
    %118 = vector.shape_cast %117 : vector<1x8x384xf32> to vector<8x384xf32>
    %cst_35 = arith.constant dense<0.000000e+00> : vector<8x256xf32>
    %119 = tpu.matmul %113, %12, %cst_35 {dimension_numbers = #tpu.dot_dimension_numbers<[1], [0], [0], [1], [0, 0, 1, 1], [], []>} : vector<8x128xf32>, vector<128x256xf32>, vector<8x256xf32> -> vector<8x256xf32>
    %120 = vector.extract_strided_slice %118 {offsets = [0, 0], sizes = [8, 128], strides = [1, 1]} : vector<8x384xf32> to vector<8x128xf32>
    %121 = vector.extract_strided_slice %119 {offsets = [0, 0], sizes = [8, 128], strides = [1, 1]} : vector<8x256xf32> to vector<8x128xf32>
    %122 = arith.addf %120, %121 : vector<8x128xf32>
    %123 = arith.negf %122 : vector<8x128xf32>
    %124 = math.exp %123 : vector<8x128xf32>
    %cst_36 = arith.constant 1.000000e+00 : f32
    %125 = vector.broadcast %cst_36 : f32 to vector<8x128xf32>
    %126 = arith.addf %125, %124 : vector<8x128xf32>
    %127 = arith.divf %125, %126 : vector<8x128xf32>
    %128 = vector.extract_strided_slice %118 {offsets = [0, 128], sizes = [8, 128], strides = [1, 1]} : vector<8x384xf32> to vector<8x128xf32>
    %129 = vector.extract_strided_slice %119 {offsets = [0, 128], sizes = [8, 128], strides = [1, 1]} : vector<8x256xf32> to vector<8x128xf32>
    %130 = arith.addf %128, %129 : vector<8x128xf32>
    %131 = arith.negf %130 : vector<8x128xf32>
    %132 = math.exp %131 : vector<8x128xf32>
    %cst_37 = arith.constant 1.000000e+00 : f32
    %133 = vector.broadcast %cst_37 : f32 to vector<8x128xf32>
    %134 = arith.addf %133, %132 : vector<8x128xf32>
    %135 = arith.divf %133, %134 : vector<8x128xf32>
    %cst_38 = arith.constant dense<0.000000e+00> : vector<8x128xf32>
    %136 = tpu.matmul %113, %13, %cst_38 {dimension_numbers = #tpu.dot_dimension_numbers<[1], [0], [0], [1], [0, 0, 1, 1], [], []>} : vector<8x128xf32>, vector<128x128xf32>, vector<8x128xf32> -> vector<8x128xf32>
    %137 = vector.extract_strided_slice %118 {offsets = [0, 256], sizes = [8, 128], strides = [1, 1]} : vector<8x384xf32> to vector<8x128xf32>
    %138 = arith.addf %136, %16 : vector<8x128xf32>
    %139 = arith.mulf %127, %138 : vector<8x128xf32>
    %140 = arith.addf %137, %139 : vector<8x128xf32>
    %141 = math.tanh %140 : vector<8x128xf32>
    %cst_39 = arith.constant 1.000000e+00 : f32
    %142 = vector.broadcast %cst_39 : f32 to vector<8x128xf32>
    %143 = arith.subf %142, %135 : vector<8x128xf32>
    %144 = arith.mulf %143, %141 : vector<8x128xf32>
    %145 = arith.mulf %135, %113 : vector<8x128xf32>
    %146 = arith.addf %144, %145 : vector<8x128xf32>
    %c3 = arith.constant 3 : index
    %c0_40 = arith.constant 0 : index
    %c0_41 = arith.constant 0 : index
    %147 = vector.load %arg7[%c3, %c0_40, %c0_41] : memref<8x8x128xf32, #tpu.memory_space<vmem>>, vector<1x8x128xf32>
    %148 = vector.shape_cast %147 : vector<1x8x128xf32> to vector<8x128xf32>
    %149 = vector.shape_cast %146 : vector<8x128xf32> to vector<1x8x128xf32>
    tpu.vector_store %arg7[%c3, %c0_40, %c0_41], %149 {strides = array<i32>} : memref<8x8x128xf32, #tpu.memory_space<vmem>>, vector<1x8x128xf32>,
    %150 = vector.extract_strided_slice %10 {offsets = [4, 0, 0], sizes = [1, 8, 384], strides = [1, 1, 1]} : vector<8x8x384xf32> to vector<1x8x384xf32>
    %151 = vector.shape_cast %150 : vector<1x8x384xf32> to vector<8x384xf32>
    %cst_42 = arith.constant dense<0.000000e+00> : vector<8x256xf32>
    %152 = tpu.matmul %146, %12, %cst_42 {dimension_numbers = #tpu.dot_dimension_numbers<[1], [0], [0], [1], [0, 0, 1, 1], [], []>} : vector<8x128xf32>, vector<128x256xf32>, vector<8x256xf32> -> vector<8x256xf32>
    %153 = vector.extract_strided_slice %151 {offsets = [0, 0], sizes = [8, 128], strides = [1, 1]} : vector<8x384xf32> to vector<8x128xf32>
    %154 = vector.extract_strided_slice %152 {offsets = [0, 0], sizes = [8, 128], strides = [1, 1]} : vector<8x256xf32> to vector<8x128xf32>
    %155 = arith.addf %153, %154 : vector<8x128xf32>
    %156 = arith.negf %155 : vector<8x128xf32>
    %157 = math.exp %156 : vector<8x128xf32>
    %cst_43 = arith.constant 1.000000e+00 : f32
    %158 = vector.broadcast %cst_43 : f32 to vector<8x128xf32>
    %159 = arith.addf %158, %157 : vector<8x128xf32>
    %160 = arith.divf %158, %159 : vector<8x128xf32>
    %161 = vector.extract_strided_slice %151 {offsets = [0, 128], sizes = [8, 128], strides = [1, 1]} : vector<8x384xf32> to vector<8x128xf32>
    %162 = vector.extract_strided_slice %152 {offsets = [0, 128], sizes = [8, 128], strides = [1, 1]} : vector<8x256xf32> to vector<8x128xf32>
    %163 = arith.addf %161, %162 : vector<8x128xf32>
    %164 = arith.negf %163 : vector<8x128xf32>
    %165 = math.exp %164 : vector<8x128xf32>
    %cst_44 = arith.constant 1.000000e+00 : f32
    %166 = vector.broadcast %cst_44 : f32 to vector<8x128xf32>
    %167 = arith.addf %166, %165 : vector<8x128xf32>
    %168 = arith.divf %166, %167 : vector<8x128xf32>
    %cst_45 = arith.constant dense<0.000000e+00> : vector<8x128xf32>
    %169 = tpu.matmul %146, %13, %cst_45 {dimension_numbers = #tpu.dot_dimension_numbers<[1], [0], [0], [1], [0, 0, 1, 1], [], []>} : vector<8x128xf32>, vector<128x128xf32>, vector<8x128xf32> -> vector<8x128xf32>
    %170 = vector.extract_strided_slice %151 {offsets = [0, 256], sizes = [8, 128], strides = [1, 1]} : vector<8x384xf32> to vector<8x128xf32>
    %171 = arith.addf %169, %16 : vector<8x128xf32>
    %172 = arith.mulf %160, %171 : vector<8x128xf32>
    %173 = arith.addf %170, %172 : vector<8x128xf32>
    %174 = math.tanh %173 : vector<8x128xf32>
    %cst_46 = arith.constant 1.000000e+00 : f32
    %175 = vector.broadcast %cst_46 : f32 to vector<8x128xf32>
    %176 = arith.subf %175, %168 : vector<8x128xf32>
    %177 = arith.mulf %176, %174 : vector<8x128xf32>
    %178 = arith.mulf %168, %146 : vector<8x128xf32>
    %179 = arith.addf %177, %178 : vector<8x128xf32>
    %c4 = arith.constant 4 : index
    %c0_47 = arith.constant 0 : index
    %c0_48 = arith.constant 0 : index
    %180 = vector.load %arg7[%c4, %c0_47, %c0_48] : memref<8x8x128xf32, #tpu.memory_space<vmem>>, vector<1x8x128xf32>
    %181 = vector.shape_cast %180 : vector<1x8x128xf32> to vector<8x128xf32>
    %182 = vector.shape_cast %179 : vector<8x128xf32> to vector<1x8x128xf32>
    tpu.vector_store %arg7[%c4, %c0_47, %c0_48], %182 {strides = array<i32>} : memref<8x8x128xf32, #tpu.memory_space<vmem>>, vector<1x8x128xf32>,
    %183 = vector.extract_strided_slice %10 {offsets = [5, 0, 0], sizes = [1, 8, 384], strides = [1, 1, 1]} : vector<8x8x384xf32> to vector<1x8x384xf32>
    %184 = vector.shape_cast %183 : vector<1x8x384xf32> to vector<8x384xf32>
    %cst_49 = arith.constant dense<0.000000e+00> : vector<8x256xf32>
    %185 = tpu.matmul %179, %12, %cst_49 {dimension_numbers = #tpu.dot_dimension_numbers<[1], [0], [0], [1], [0, 0, 1, 1], [], []>} : vector<8x128xf32>, vector<128x256xf32>, vector<8x256xf32> -> vector<8x256xf32>
    %186 = vector.extract_strided_slice %184 {offsets = [0, 0], sizes = [8, 128], strides = [1, 1]} : vector<8x384xf32> to vector<8x128xf32>
    %187 = vector.extract_strided_slice %185 {offsets = [0, 0], sizes = [8, 128], strides = [1, 1]} : vector<8x256xf32> to vector<8x128xf32>
    %188 = arith.addf %186, %187 : vector<8x128xf32>
    %189 = arith.negf %188 : vector<8x128xf32>
    %190 = math.exp %189 : vector<8x128xf32>
    %cst_50 = arith.constant 1.000000e+00 : f32
    %191 = vector.broadcast %cst_50 : f32 to vector<8x128xf32>
    %192 = arith.addf %191, %190 : vector<8x128xf32>
    %193 = arith.divf %191, %192 : vector<8x128xf32>
    %194 = vector.extract_strided_slice %184 {offsets = [0, 128], sizes = [8, 128], strides = [1, 1]} : vector<8x384xf32> to vector<8x128xf32>
    %195 = vector.extract_strided_slice %185 {offsets = [0, 128], sizes = [8, 128], strides = [1, 1]} : vector<8x256xf32> to vector<8x128xf32>
    %196 = arith.addf %194, %195 : vector<8x128xf32>
    %197 = arith.negf %196 : vector<8x128xf32>
    %198 = math.exp %197 : vector<8x128xf32>
    %cst_51 = arith.constant 1.000000e+00 : f32
    %199 = vector.broadcast %cst_51 : f32 to vector<8x128xf32>
    %200 = arith.addf %199, %198 : vector<8x128xf32>
    %201 = arith.divf %199, %200 : vector<8x128xf32>
    %cst_52 = arith.constant dense<0.000000e+00> : vector<8x128xf32>
    %202 = tpu.matmul %179, %13, %cst_52 {dimension_numbers = #tpu.dot_dimension_numbers<[1], [0], [0], [1], [0, 0, 1, 1], [], []>} : vector<8x128xf32>, vector<128x128xf32>, vector<8x128xf32> -> vector<8x128xf32>
    %203 = vector.extract_strided_slice %184 {offsets = [0, 256], sizes = [8, 128], strides = [1, 1]} : vector<8x384xf32> to vector<8x128xf32>
    %204 = arith.addf %202, %16 : vector<8x128xf32>
    %205 = arith.mulf %193, %204 : vector<8x128xf32>
    %206 = arith.addf %203, %205 : vector<8x128xf32>
    %207 = math.tanh %206 : vector<8x128xf32>
    %cst_53 = arith.constant 1.000000e+00 : f32
    %208 = vector.broadcast %cst_53 : f32 to vector<8x128xf32>
    %209 = arith.subf %208, %201 : vector<8x128xf32>
    %210 = arith.mulf %209, %207 : vector<8x128xf32>
    %211 = arith.mulf %201, %179 : vector<8x128xf32>
    %212 = arith.addf %210, %211 : vector<8x128xf32>
    %c5 = arith.constant 5 : index
    %c0_54 = arith.constant 0 : index
    %c0_55 = arith.constant 0 : index
    %213 = vector.load %arg7[%c5, %c0_54, %c0_55] : memref<8x8x128xf32, #tpu.memory_space<vmem>>, vector<1x8x128xf32>
    %214 = vector.shape_cast %213 : vector<1x8x128xf32> to vector<8x128xf32>
    %215 = vector.shape_cast %212 : vector<8x128xf32> to vector<1x8x128xf32>
    tpu.vector_store %arg7[%c5, %c0_54, %c0_55], %215 {strides = array<i32>} : memref<8x8x128xf32, #tpu.memory_space<vmem>>, vector<1x8x128xf32>,
    %216 = vector.extract_strided_slice %10 {offsets = [6, 0, 0], sizes = [1, 8, 384], strides = [1, 1, 1]} : vector<8x8x384xf32> to vector<1x8x384xf32>
    %217 = vector.shape_cast %216 : vector<1x8x384xf32> to vector<8x384xf32>
    %cst_56 = arith.constant dense<0.000000e+00> : vector<8x256xf32>
    %218 = tpu.matmul %212, %12, %cst_56 {dimension_numbers = #tpu.dot_dimension_numbers<[1], [0], [0], [1], [0, 0, 1, 1], [], []>} : vector<8x128xf32>, vector<128x256xf32>, vector<8x256xf32> -> vector<8x256xf32>
    %219 = vector.extract_strided_slice %217 {offsets = [0, 0], sizes = [8, 128], strides = [1, 1]} : vector<8x384xf32> to vector<8x128xf32>
    %220 = vector.extract_strided_slice %218 {offsets = [0, 0], sizes = [8, 128], strides = [1, 1]} : vector<8x256xf32> to vector<8x128xf32>
    %221 = arith.addf %219, %220 : vector<8x128xf32>
    %222 = arith.negf %221 : vector<8x128xf32>
    %223 = math.exp %222 : vector<8x128xf32>
    %cst_57 = arith.constant 1.000000e+00 : f32
    %224 = vector.broadcast %cst_57 : f32 to vector<8x128xf32>
    %225 = arith.addf %224, %223 : vector<8x128xf32>
    %226 = arith.divf %224, %225 : vector<8x128xf32>
    %227 = vector.extract_strided_slice %217 {offsets = [0, 128], sizes = [8, 128], strides = [1, 1]} : vector<8x384xf32> to vector<8x128xf32>
    %228 = vector.extract_strided_slice %218 {offsets = [0, 128], sizes = [8, 128], strides = [1, 1]} : vector<8x256xf32> to vector<8x128xf32>
    %229 = arith.addf %227, %228 : vector<8x128xf32>
    %230 = arith.negf %229 : vector<8x128xf32>
    %231 = math.exp %230 : vector<8x128xf32>
    %cst_58 = arith.constant 1.000000e+00 : f32
    %232 = vector.broadcast %cst_58 : f32 to vector<8x128xf32>
    %233 = arith.addf %232, %231 : vector<8x128xf32>
    %234 = arith.divf %232, %233 : vector<8x128xf32>
    %cst_59 = arith.constant dense<0.000000e+00> : vector<8x128xf32>
    %235 = tpu.matmul %212, %13, %cst_59 {dimension_numbers = #tpu.dot_dimension_numbers<[1], [0], [0], [1], [0, 0, 1, 1], [], []>} : vector<8x128xf32>, vector<128x128xf32>, vector<8x128xf32> -> vector<8x128xf32>
    %236 = vector.extract_strided_slice %217 {offsets = [0, 256], sizes = [8, 128], strides = [1, 1]} : vector<8x384xf32> to vector<8x128xf32>
    %237 = arith.addf %235, %16 : vector<8x128xf32>
    %238 = arith.mulf %226, %237 : vector<8x128xf32>
    %239 = arith.addf %236, %238 : vector<8x128xf32>
    %240 = math.tanh %239 : vector<8x128xf32>
    %cst_60 = arith.constant 1.000000e+00 : f32
    %241 = vector.broadcast %cst_60 : f32 to vector<8x128xf32>
    %242 = arith.subf %241, %234 : vector<8x128xf32>
    %243 = arith.mulf %242, %240 : vector<8x128xf32>
    %244 = arith.mulf %234, %212 : vector<8x128xf32>
    %245 = arith.addf %243, %244 : vector<8x128xf32>
    %c6 = arith.constant 6 : index
    %c0_61 = arith.constant 0 : index
    %c0_62 = arith.constant 0 : index
    %246 = vector.load %arg7[%c6, %c0_61, %c0_62] : memref<8x8x128xf32, #tpu.memory_space<vmem>>, vector<1x8x128xf32>
    %247 = vector.shape_cast %246 : vector<1x8x128xf32> to vector<8x128xf32>
    %248 = vector.shape_cast %245 : vector<8x128xf32> to vector<1x8x128xf32>
    tpu.vector_store %arg7[%c6, %c0_61, %c0_62], %248 {strides = array<i32>} : memref<8x8x128xf32, #tpu.memory_space<vmem>>, vector<1x8x128xf32>,
    %249 = vector.extract_strided_slice %10 {offsets = [7, 0, 0], sizes = [1, 8, 384], strides = [1, 1, 1]} : vector<8x8x384xf32> to vector<1x8x384xf32>
    %250 = vector.shape_cast %249 : vector<1x8x384xf32> to vector<8x384xf32>
    %cst_63 = arith.constant dense<0.000000e+00> : vector<8x256xf32>
    %251 = tpu.matmul %245, %12, %cst_63 {dimension_numbers = #tpu.dot_dimension_numbers<[1], [0], [0], [1], [0, 0, 1, 1], [], []>} : vector<8x128xf32>, vector<128x256xf32>, vector<8x256xf32> -> vector<8x256xf32>
    %252 = vector.extract_strided_slice %250 {offsets = [0, 0], sizes = [8, 128], strides = [1, 1]} : vector<8x384xf32> to vector<8x128xf32>
    %253 = vector.extract_strided_slice %251 {offsets = [0, 0], sizes = [8, 128], strides = [1, 1]} : vector<8x256xf32> to vector<8x128xf32>
    %254 = arith.addf %252, %253 : vector<8x128xf32>
    %255 = arith.negf %254 : vector<8x128xf32>
    %256 = math.exp %255 : vector<8x128xf32>
    %cst_64 = arith.constant 1.000000e+00 : f32
    %257 = vector.broadcast %cst_64 : f32 to vector<8x128xf32>
    %258 = arith.addf %257, %256 : vector<8x128xf32>
    %259 = arith.divf %257, %258 : vector<8x128xf32>
    %260 = vector.extract_strided_slice %250 {offsets = [0, 128], sizes = [8, 128], strides = [1, 1]} : vector<8x384xf32> to vector<8x128xf32>
    %261 = vector.extract_strided_slice %251 {offsets = [0, 128], sizes = [8, 128], strides = [1, 1]} : vector<8x256xf32> to vector<8x128xf32>
    %262 = arith.addf %260, %261 : vector<8x128xf32>
    %263 = arith.negf %262 : vector<8x128xf32>
    %264 = math.exp %263 : vector<8x128xf32>
    %cst_65 = arith.constant 1.000000e+00 : f32
    %265 = vector.broadcast %cst_65 : f32 to vector<8x128xf32>
    %266 = arith.addf %265, %264 : vector<8x128xf32>
    %267 = arith.divf %265, %266 : vector<8x128xf32>
    %cst_66 = arith.constant dense<0.000000e+00> : vector<8x128xf32>
    %268 = tpu.matmul %245, %13, %cst_66 {dimension_numbers = #tpu.dot_dimension_numbers<[1], [0], [0], [1], [0, 0, 1, 1], [], []>} : vector<8x128xf32>, vector<128x128xf32>, vector<8x128xf32> -> vector<8x128xf32>
    %269 = vector.extract_strided_slice %250 {offsets = [0, 256], sizes = [8, 128], strides = [1, 1]} : vector<8x384xf32> to vector<8x128xf32>
    %270 = arith.addf %268, %16 : vector<8x128xf32>
    %271 = arith.mulf %259, %270 : vector<8x128xf32>
    %272 = arith.addf %269, %271 : vector<8x128xf32>
    %273 = math.tanh %272 : vector<8x128xf32>
    %cst_67 = arith.constant 1.000000e+00 : f32
    %274 = vector.broadcast %cst_67 : f32 to vector<8x128xf32>
    %275 = arith.subf %274, %267 : vector<8x128xf32>
    %276 = arith.mulf %275, %273 : vector<8x128xf32>
    %277 = arith.mulf %267, %245 : vector<8x128xf32>
    %278 = arith.addf %276, %277 : vector<8x128xf32>
    %c7 = arith.constant 7 : index
    %c0_68 = arith.constant 0 : index
    %c0_69 = arith.constant 0 : index
    %279 = vector.load %arg7[%c7, %c0_68, %c0_69] : memref<8x8x128xf32, #tpu.memory_space<vmem>>, vector<1x8x128xf32>
    %280 = vector.shape_cast %279 : vector<1x8x128xf32> to vector<8x128xf32>
    %281 = vector.shape_cast %278 : vector<8x128xf32> to vector<1x8x128xf32>
    tpu.vector_store %arg7[%c7, %c0_68, %c0_69], %281 {strides = array<i32>} : memref<8x8x128xf32, #tpu.memory_space<vmem>>, vector<1x8x128xf32>,
    %c0_70 = arith.constant 0 : index
    %c0_71 = arith.constant 0 : index
    %282 = vector.load %arg9[%c0_70, %c0_71] : memref<8x128xf32, #tpu.memory_space<vmem>>, vector<8x128xf32>
    tpu.vector_store %arg9[%c0_70, %c0_71], %278 {strides = array<i32>} : memref<8x128xf32, #tpu.memory_space<vmem>>, vector<8x128xf32>,
    %c0_i32_72 = arith.constant 0 : i32
    %283 = arith.cmpi eq, %arg1, %c0_i32_72 : i32
    %284 = arith.extui %283 : i1 to i32
    %c0_i32_73 = arith.constant 0 : i32
    %285 = arith.cmpi ne, %284, %c0_i32_73 : i32
    scf.if %285 {
      %c0_74 = arith.constant 0 : index
      %c0_75 = arith.constant 0 : index
      %286 = vector.load %arg8[%c0_74, %c0_75] : memref<8x128xf32, #tpu.memory_space<vmem>>, vector<8x128xf32>
      tpu.vector_store %arg8[%c0_74, %c0_75], %278 {strides = array<i32>} : memref<8x128xf32, #tpu.memory_space<vmem>>, vector<8x128xf32>,
    } else {
    }
    return
  }
  func.func @transform_0(%arg0: i32, %arg1: i32) -> (i32, i32, i32) {
    %c0_i32 = arith.constant 0 : i32
    %c0_i32_0 = arith.constant 0 : i32
    return %arg1, %arg0, %c0_i32 : i32, i32, i32
  }
  func.func @transform_1(%arg0: i32, %arg1: i32) -> (i32, i32) {
    %c0_i32 = arith.constant 0 : i32
    %c0_i32_0 = arith.constant 0 : i32
    %c0_i32_1 = arith.constant 0 : i32
    return %c0_i32, %c0_i32_0 : i32, i32
  }
  func.func @transform_2(%arg0: i32, %arg1: i32) -> (i32, i32) {
    %c0_i32 = arith.constant 0 : i32
    %c0_i32_0 = arith.constant 0 : i32
    %c0_i32_1 = arith.constant 0 : i32
    return %c0_i32, %c0_i32_0 : i32, i32
  }
  func.func @transform_3(%arg0: i32, %arg1: i32) -> (i32, i32) {
    %c0_i32 = arith.constant 0 : i32
    %c0_i32_0 = arith.constant 0 : i32
    %c0_i32_1 = arith.constant 0 : i32
    return %c0_i32, %c0_i32_0 : i32, i32
  }
  func.func @transform_4(%arg0: i32, %arg1: i32) -> (i32, i32) {
    %c0_i32 = arith.constant 0 : i32
    %c0_i32_0 = arith.constant 0 : i32
    %c0_i32_1 = arith.constant 0 : i32
    return %c0_i32, %c0_i32_0 : i32, i32
  }
  func.func @transform_5(%arg0: i32, %arg1: i32) -> (i32, i32, i32) {
    %c0_i32 = arith.constant 0 : i32
    %c0_i32_0 = arith.constant 0 : i32
    return %arg1, %arg0, %c0_i32 : i32, i32, i32
  }
  func.func @transform_6(%arg0: i32, %arg1: i32) -> (i32, i32) {
    %c0_i32 = arith.constant 0 : i32
    %c0_i32_0 = arith.constant 0 : i32
    return %arg0, %c0_i32 : i32, i32
  }
}

</mosaic_0001>

<llo_original>
// kernel: encoder_forward.1
$region0: #{encoder_forward.1}
  #allocation0 [shape = 'u32[]', space=smem, size = 0x4, offset = 0x4, fixed_abs, tag = 'smem constant byte address 0x4 - core index']
  #allocation1 [shape = 'u32[72,128]{1,0:T(1,128)}', space=vmem, size = 0x9000, scoped, tag = 'internal scratch']
  #allocation2 [shape = 'f32[8,128]{1,0:T(8,128)}', space=vmem, size = 0x1000, scoped, tag = 'scratch operand']
  %s0 = inlined_call_operand.vmem [shape: f32[8,8,16], index: 0, kind: input, shape index: {}]
  %s1 = inlined_call_operand.vmem [shape: f32[16,384], index: 1, kind: input, shape index: {}]
  %s2 = inlined_call_operand.vmem [shape: f32[1,384], index: 2, kind: input, shape index: {}]
  %s3 = inlined_call_operand.hbm [shape: f32[128,384], index: 3, kind: input, shape index: {}]
  %s4 = inlined_call_operand.vmem [shape: f32[1,128], index: 4, kind: input, shape index: {}]
  %s5 = inlined_call_operand.vmem [shape: f32[8,8,128], index: 5, kind: output, shape index: {0}]
  %s6 = inlined_call_operand.vmem [shape: f32[8,128], index: 6, kind: output, shape index: {1}]
  %7 = xla_tuple %s5, %s6
  %s8 = sld [smem:[#allocation0]]
  $region50: #{encoder_forward.1} parent=0
    _
  %s10 = ssub.s32 1, %s8
  %s11 = scalar_select 0, %s10, %s8
  $region1: #{encoder_forward.1} parent=0
    #allocation3 [shape = 'u8[196608]{0}', space=vmem, size = 0x30000, scoped, tag = 'input window, operand 3, single buffered']
    #allocation4 [shape = 's32[1]{0}', space=sflag, size = 0x4, scoped, tag = 'scoped memory for encoder_forward.1']
    %12 = vsyncpa [#allocation4], 0
    // Predicated region
    $region2: #{encoder_forward.1} parent=1 // pred_check
      _
    $region3: #{encoder_forward.1} parent=1 // pred_check_branch
      %14 = sbr.rel (0) target = $region5
    $region4: #{encoder_forward.1} parent=1 // pred_region
      _
    $region5: #{encoder_forward.1} parent=1 // pred_fallthru
      _
    // Predicated region
    $region6: #{encoder_forward.1} parent=1 // pred_check
      _
    $region7: #{encoder_forward.1} parent=1 // pred_check_branch
      %16 = sbr.rel (0) target = $region9
    $region8: #{encoder_forward.1} parent=1 // pred_region
      _
    $region9: #{encoder_forward.1} parent=1 // pred_fallthru
      _
    // Predicated region
    $region10: #{encoder_forward.1} parent=1 // pred_check
      _
    $region11: #{encoder_forward.1} parent=1 // pred_check_branch
      %18 = sbr.rel (0) target = $region13
    $region12: #{encoder_forward.1} parent=1 // pred_region
      _
    $region13: #{encoder_forward.1} parent=1 // pred_fallthru
      _
    // Predicated region
    $region14: #{encoder_forward.1} parent=1 // pred_check
      _
    $region15: #{encoder_forward.1} parent=1 // pred_check_branch
      %20 = sbr.rel (0) target = $region17
    $region16: #{encoder_forward.1} parent=1 // pred_region
      %22 = vsyncadd [#allocation4], 0
      %s23 = sshll.u32 %s3, 4
      %s24 = int_to_ptr.hbm [resolvable:$true] %s23
      %s25 = sshll.u32 [#allocation3], 4
      %s26 = int_to_ptr.vmem [resolvable:$true] %s25
      %31 = dma.hbm_to_vmem [thread:$0]  %s24, 6144, %s26, [#allocation4], 384, 384, 24
    $region17: #{encoder_forward.1} parent=1 // pred_fallthru
      _
    // Predicated region
    $region18: #{encoder_forward.1} parent=1 // pred_check
      _
    $region19: #{encoder_forward.1} parent=1 // pred_check_branch
      %33 = sbr.rel (0) target = $region21
    $region20: #{encoder_forward.1} parent=1 // pred_region
      _
    $region21: #{encoder_forward.1} parent=1 // pred_fallthru
      _
    // Predicated region
    $region22: #{encoder_forward.1} parent=1 // pred_check
      _
    $region23: #{encoder_forward.1} parent=1 // pred_check_branch
      %35 = sbr.rel (0) target = $region25
    $region24: #{encoder_forward.1} parent=1 // pred_region
      %37 = dma.done [#allocation4], 6144
    $region25: #{encoder_forward.1} parent=1 // pred_fallthru
      _
    %p38 = scmp.eq.s32.totalorder 0, 0
    // Predicated region
    $region26: #{encoder_forward.1} parent=1 // pred_check
      %p39 = pneg %p38
    $region27: #{encoder_forward.1} parent=1 // pred_check_branch
      %41 = sbr.rel (%p39) target = $region29
    $region28: #{encoder_forward.1} parent=1 // pred_region
      %42 = vst [vmem:[#allocation2] sm:$0xff] 0.0
    $region29: #{encoder_forward.1} parent=1 // pred_fallthru
      _
    %v43 = vld [vmem:[%s0] sm:$0xff]
    %v44 = vld [vmem:[%s0 + $0x8] sm:$0xff]
    %v45 = vld [vmem:[%s0 + $0x10] sm:$0xff]
    %v46 = vld [vmem:[%s0 + $0x18] sm:$0xff]
    %v47 = vld [vmem:[%s0 + $0x20] sm:$0xff]
    %v48 = vld [vmem:[%s0 + $0x28] sm:$0xff]
    %v49 = vld [vmem:[%s0 + $0x30] sm:$0xff]
    %v50 = vld [vmem:[%s0 + $0x38] sm:$0xff]
    %v51 = vld [vmem:[%s1] sm:$0xff]
    %v52 = vld [vmem:[%s1 + $0x8] sm:$0xff]
    %v53 = vld [vmem:[%s1 + $0x10] sm:$0xff]
    %v54 = vld [vmem:[%s1 + $0x18] sm:$0xff]
    %v55 = vld [vmem:[%s1 + $0x20] sm:$0xff]
    %v56 = vld [vmem:[%s1 + $0x28] sm:$0xff]
    %v57 = vld [vmem:[%s2] sm:$0x7]
    %v59 = vperm.slane %v57, 0
    %v60 = vperm.slane %v57, 1
    %v61 = vperm.slane %v57, 2
    %vm65 = vcmask 130048
    %v67 = vsel %vm65, %v43, 0
    %v70 = vsel %vm65, %v44, 0
    %v73 = vsel %vm65, %v45, 0
    %v76 = vsel %vm65, %v46, 0
    %v79 = vsel %vm65, %v47, 0
    %v82 = vsel %vm65, %v48, 0
    %v85 = vsel %vm65, %v49, 0
    %v88 = vsel %vm65, %v50, 0
    %90 = vmatpush.msra.mxu0 0.0
    %91 = vmatpush.msra.mxu0 0.0
    %92 = vmatpush.msra.mxu0 0.0
    %93 = vmatpush.msra.mxu0 0.0
    %94 = vmatpush.msra.mxu0 0.0
    %95 = vmatpush.msra.mxu0 0.0
    %96 = vmatpush.msra.mxu0 0.0
    %97 = vmatpush.msra.mxu0 0.0
    %98 = vmatpush.msra.mxu0 0.0
    %99 = vmatpush.msra.mxu0 0.0
    %100 = vmatpush.msra.mxu0 0.0
    %101 = vmatpush.msra.mxu0 0.0
    %102 = vmatpush.msra.mxu0 0.0
    %103 = vmatpush.msra.mxu0 0.0
    %104 = vmatpush.msra.mxu0 %v54
    %105 = vmatpush.msra.mxu0 %v51
    %106 = vmatmul.f32.gmra.mxu0 %v67
    %v107 = vpop.f32.mrf.mxu0
    %v108 = vadd.f32 %v59, %v107
    %109 = vmatmul.f32.gmra.mxu0 %v70
    %v110 = vpop.f32.mrf.mxu0
    %v111 = vadd.f32 %v59, %v110
    %112 = vmatmul.f32.gmra.mxu0 %v73
    %v113 = vpop.f32.mrf.mxu0
    %v114 = vadd.f32 %v59, %v113
    %115 = vmatmul.f32.gmra.mxu0 %v76
    %v116 = vpop.f32.mrf.mxu0
    %v117 = vadd.f32 %v59, %v116
    %118 = vmatmul.f32.gmra.mxu0 %v79
    %v119 = vpop.f32.mrf.mxu0
    %v120 = vadd.f32 %v59, %v119
    %121 = vmatmul.f32.gmra.mxu0 %v82
    %v122 = vpop.f32.mrf.mxu0
    %v123 = vadd.f32 %v59, %v122
    %124 = vmatmul.f32.gmra.mxu0 %v85
    %v125 = vpop.f32.mrf.mxu0
    %v126 = vadd.f32 %v59, %v125
    %127 = vmatmul.f32.gmra.mxu0 %v88
    %v128 = vpop.f32.mrf.mxu0
    %v129 = vadd.f32 %v59, %v128
    %130 = vdwg.mxu0
    %131 = vmatpush.msra.mxu0 0.0
    %132 = vmatpush.msra.mxu0 0.0
    %133 = vmatpush.msra.mxu0 0.0
    %134 = vmatpush.msra.mxu0 0.0
    %135 = vmatpush.msra.mxu0 0.0
    %136 = vmatpush.msra.mxu0 0.0
    %137 = vmatpush.msra.mxu0 0.0
    %138 = vmatpush.msra.mxu0 0.0
    %139 = vmatpush.msra.mxu0 0.0
    %140 = vmatpush.msra.mxu0 0.0
    %141 = vmatpush.msra.mxu0 0.0
    %142 = vmatpush.msra.mxu0 0.0
    %143 = vmatpush.msra.mxu0 0.0
    %144 = vmatpush.msra.mxu0 0.0
    %145 = vmatpush.msra.mxu0 %v55
    %146 = vmatpush.msra.mxu0 %v52
    %147 = vmatmul.f32.gmra.mxu0 %v67
    %v148 = vpop.f32.mrf.mxu0
    %v149 = vadd.f32 %v60, %v148
    %150 = vmatmul.f32.gmra.mxu0 %v70
    %v151 = vpop.f32.mrf.mxu0
    %v152 = vadd.f32 %v60, %v151
    %153 = vmatmul.f32.gmra.mxu0 %v73
    %v154 = vpop.f32.mrf.mxu0
    %v155 = vadd.f32 %v60, %v154
    %156 = vmatmul.f32.gmra.mxu0 %v76
    %v157 = vpop.f32.mrf.mxu0
    %v158 = vadd.f32 %v60, %v157
    %159 = vmatmul.f32.gmra.mxu0 %v79
    %v160 = vpop.f32.mrf.mxu0
    %v161 = vadd.f32 %v60, %v160
    %162 = vmatmul.f32.gmra.mxu0 %v82
    %v163 = vpop.f32.mrf.mxu0
    %v164 = vadd.f32 %v60, %v163
    %165 = vmatmul.f32.gmra.mxu0 %v85
    %v166 = vpop.f32.mrf.mxu0
    %v167 = vadd.f32 %v60, %v166
    %168 = vmatmul.f32.gmra.mxu0 %v88
    %v169 = vpop.f32.mrf.mxu0
    %v170 = vadd.f32 %v60, %v169
    %171 = vdwg.mxu0
    %172 = vmatpush.msra.mxu0 0.0
    %173 = vmatpush.msra.mxu0 0.0
    %174 = vmatpush.msra.mxu0 0.0
    %175 = vmatpush.msra.mxu0 0.0
    %176 = vmatpush.msra.mxu0 0.0
    %177 = vmatpush.msra.mxu0 0.0
    %178 = vmatpush.msra.mxu0 0.0
    %179 = vmatpush.msra.mxu0 0.0
    %180 = vmatpush.msra.mxu0 0.0
    %181 = vmatpush.msra.mxu0 0.0
    %182 = vmatpush.msra.mxu0 0.0
    %183 = vmatpush.msra.mxu0 0.0
    %184 = vmatpush.msra.mxu0 0.0
    %185 = vmatpush.msra.mxu0 0.0
    %186 = vmatpush.msra.mxu0 %v56
    %187 = vmatpush.msra.mxu0 %v53
    %188 = vmatmul.f32.gmra.mxu0 %v67
    %v189 = vpop.f32.mrf.mxu0
    %v190 = vadd.f32 %v61, %v189
    %191 = vmatmul.f32.gmra.mxu0 %v70
    %v192 = vpop.f32.mrf.mxu0
    %v193 = vadd.f32 %v61, %v192
    %194 = vmatmul.f32.gmra.mxu0 %v73
    %v195 = vpop.f32.mrf.mxu0
    %v196 = vadd.f32 %v61, %v195
    %197 = vmatmul.f32.gmra.mxu0 %v76
    %v198 = vpop.f32.mrf.mxu0
    %v199 = vadd.f32 %v61, %v198
    %200 = vmatmul.f32.gmra.mxu0 %v79
    %v201 = vpop.f32.mrf.mxu0
    %v202 = vadd.f32 %v61, %v201
    %203 = vmatmul.f32.gmra.mxu0 %v82
    %v204 = vpop.f32.mrf.mxu0
    %v205 = vadd.f32 %v61, %v204
    %206 = vmatmul.f32.gmra.mxu0 %v85
    %v207 = vpop.f32.mrf.mxu0
    %v208 = vadd.f32 %v61, %v207
    %209 = vmatmul.f32.gmra.mxu0 %v88
    %v210 = vpop.f32.mrf.mxu0
    %v211 = vadd.f32 %v61, %v210
    %212 = vdwg.mxu0
    %v213 = vld [vmem:[#allocation3] sm:$0xff]
    %v214 = vld [vmem:[#allocation3 + $0x8] sm:$0xff]
    %v215 = vld [vmem:[#allocation3 + $0x10] sm:$0xff]
    %v216 = vld [vmem:[#allocation3 + $0x18] sm:$0xff]
    %v217 = vld [vmem:[#allocation3 + $0x20] sm:$0xff]
    %v218 = vld [vmem:[#allocation3 + $0x28] sm:$0xff]
    %v219 = vld [vmem:[#allocation3 + $0x30] sm:$0xff]
    %v220 = vld [vmem:[#allocation3 + $0x38] sm:$0xff]
    %v221 = vld [vmem:[#allocation3 + $0x40] sm:$0xff]
    %v222 = vld [vmem:[#allocation3 + $0x48] sm:$0xff]
    %v223 = vld [vmem:[#allocation3 + $0x50] sm:$0xff]
    %v224 = vld [vmem:[#allocation3 + $0x58] sm:$0xff]
    %v225 = vld [vmem:[#allocation3 + $0x60] sm:$0xff]
    %v226 = vld [vmem:[#allocation3 + $0x68] sm:$0xff]
    %v227 = vld [vmem:[#allocation3 + $0x70] sm:$0xff]
    %v228 = vld [vmem:[#allocation3 + $0x78] sm:$0xff]
    %v229 = vld [vmem:[#allocation3 + $0x80] sm:$0xff]
    %v230 = vld [vmem:[#allocation3 + $0x88] sm:$0xff]
    %v231 = vld [vmem:[#allocation3 + $0x90] sm:$0xff]
    %v232 = vld [vmem:[#allocation3 + $0x98] sm:$0xff]
    %v233 = vld [vmem:[#allocation3 + $0xa0] sm:$0xff]
    %v234 = vld [vmem:[#allocation3 + $0xa8] sm:$0xff]
    %v235 = vld [vmem:[#allocation3 + $0xb0] sm:$0xff]
    %v236 = vld [vmem:[#allocation3 + $0xb8] sm:$0xff]
    %v237 = vld [vmem:[#allocation3 + $0xc0] sm:$0xff]
    %v238 = vld [vmem:[#allocation3 + $0xc8] sm:$0xff]
    %v239 = vld [vmem:[#allocation3 + $0xd0] sm:$0xff]
    %v240 = vld [vmem:[#allocation3 + $0xd8] sm:$0xff]
    %v241 = vld [vmem:[#allocation3 + $0xe0] sm:$0xff]
    %v242 = vld [vmem:[#allocation3 + $0xe8] sm:$0xff]
    %v243 = vld [vmem:[#allocation3 + $0xf0] sm:$0xff]
    %v244 = vld [vmem:[#allocation3 + $0xf8] sm:$0xff]
    %v245 = vld [vmem:[#allocation3 + $0x100] sm:$0xff]
    %v246 = vld [vmem:[#allocation3 + $0x108] sm:$0xff]
    %v247 = vld [vmem:[#allocation3 + $0x110] sm:$0xff]
    %v248 = vld [vmem:[#allocation3 + $0x118] sm:$0xff]
    %v249 = vld [vmem:[#allocation3 + $0x120] sm:$0xff]
    %v250 = vld [vmem:[#allocation3 + $0x128] sm:$0xff]
    %v251 = vld [vmem:[#allocation3 + $0x130] sm:$0xff]
    %v252 = vld [vmem:[#allocation3 + $0x138] sm:$0xff]
    %v253 = vld [vmem:[#allocation3 + $0x140] sm:$0xff]
    %v254 = vld [vmem:[#allocation3 + $0x148] sm:$0xff]
    %v255 = vld [vmem:[#allocation3 + $0x150] sm:$0xff]
    %v256 = vld [vmem:[#allocation3 + $0x158] sm:$0xff]
    %v257 = vld [vmem:[#allocation3 + $0x160] sm:$0xff]
    %v258 = vld [vmem:[#allocation3 + $0x168] sm:$0xff]
    %v259 = vld [vmem:[#allocation3 + $0x170] sm:$0xff]
    %v260 = vld [vmem:[#allocation3 + $0x178] sm:$0xff]
    %v261 = vld [vmem:[%s4] sm:$0x1]
    %v263 = vperm.slane %v261, 0
    %v265 = vld [vmem:[#allocation2] sm:$0xff]
    %266 = vmatpush.msra.mxu0 %v258
    %267 = vmatpush.msra.mxu0 %v255
    %268 = vmatpush.msra.mxu0 %v252
    %269 = vmatpush.msra.mxu0 %v249
    %270 = vmatpush.msra.mxu0 %v246
    %271 = vmatpush.msra.mxu0 %v243
    %272 = vmatpush.msra.mxu0 %v240
    %273 = vmatpush.msra.mxu0 %v237
    %274 = vmatpush.msra.mxu0 %v234
    %275 = vmatpush.msra.mxu0 %v231
    %276 = vmatpush.msra.mxu0 %v228
    %277 = vmatpush.msra.mxu0 %v225
    %278 = vmatpush.msra.mxu0 %v222
    %279 = vmatpush.msra.mxu0 %v219
    %280 = vmatpush.msra.mxu0 %v216
    %281 = vmatpush.msra.mxu0 %v213
    %282 = vmatmul.f32.gmra.mxu0 %v265
    %v283 = vpop.f32.mrf.mxu0
    %v284 = vadd.f32 0.0, %v283
    %285 = vdwg.mxu0
    %286 = vmatpush.msra.mxu0 %v259
    %287 = vmatpush.msra.mxu0 %v256
    %288 = vmatpush.msra.mxu0 %v253
    %289 = vmatpush.msra.mxu0 %v250
    %290 = vmatpush.msra.mxu0 %v247
    %291 = vmatpush.msra.mxu0 %v244
    %292 = vmatpush.msra.mxu0 %v241
    %293 = vmatpush.msra.mxu0 %v238
    %294 = vmatpush.msra.mxu0 %v235
    %295 = vmatpush.msra.mxu0 %v232
    %296 = vmatpush.msra.mxu0 %v229
    %297 = vmatpush.msra.mxu0 %v226
    %298 = vmatpush.msra.mxu0 %v223
    %299 = vmatpush.msra.mxu0 %v220
    %300 = vmatpush.msra.mxu0 %v217
    %301 = vmatpush.msra.mxu0 %v214
    %302 = vmatmul.f32.gmra.mxu0 %v265
    %v303 = vpop.f32.mrf.mxu0
    %v304 = vadd.f32 0.0, %v303
    %305 = vdwg.mxu0
    %v306 = vadd.f32 %v108, %v284
    %v307 = vxor.u32 %v306, 2147483648
    %v308 = vmul.f32 %v307, 1.442695
    %v309 = vpow.pop %v308
    %v310 = vadd.f32 %v309, 1.0
    %v311 = vrcp.pop %v310
    %v312 = vmul.f32 %v310, %v311
    %v313 = vsub.f32 1.0, %v312
    %v314 = vmul.f32 %v311, %v313
    %v315 = vadd.f32 %v311, %v314
    %vm316 = vweird.f32 %v310
    %vm317 = vweird.f32 %v311
    %vm318 = vmor %vm316, %vm317
    %v319 = vsel %vm318, %v311, %v315
    %v320 = vand.u32 2147483647, %v310
    %vm321 = vcmp.eq.f32.partialorder %v320, 8.507059e+37
    %v322 = vand.u32 %v310, 2147483648
    %v323 = vor.u32 1.1754944e-38, %v322
    %v324 = vsel %vm321, %v323, %v319
    %v325 = vmul.f32 1.0, %v324
    %v326 = vadd.f32 %v149, %v304
    %v327 = vxor.u32 %v326, 2147483648
    %v328 = vmul.f32 %v327, 1.442695
    %v329 = vpow.pop %v328
    %v330 = vadd.f32 %v329, 1.0
    %v331 = vrcp.pop %v330
    %v332 = vmul.f32 %v330, %v331
    %v333 = vsub.f32 1.0, %v332
    %v334 = vmul.f32 %v331, %v333
    %v335 = vadd.f32 %v331, %v334
    %vm336 = vweird.f32 %v330
    %vm337 = vweird.f32 %v331
    %vm338 = vmor %vm336, %vm337
    %v339 = vsel %vm338, %v331, %v335
    %v340 = vand.u32 2147483647, %v330
    %vm341 = vcmp.eq.f32.partialorder %v340, 8.507059e+37
    %v342 = vand.u32 %v330, 2147483648
    %v343 = vor.u32 1.1754944e-38, %v342
    %v344 = vsel %vm341, %v343, %v339
    %v345 = vmul.f32 1.0, %v344
    %346 = vmatpush.msra.mxu0 %v260
    %347 = vmatpush.msra.mxu0 %v257
    %348 = vmatpush.msra.mxu0 %v254
    %349 = vmatpush.msra.mxu0 %v251
    %350 = vmatpush.msra.mxu0 %v248
    %351 = vmatpush.msra.mxu0 %v245
    %352 = vmatpush.msra.mxu0 %v242
    %353 = vmatpush.msra.mxu0 %v239
    %354 = vmatpush.msra.mxu0 %v236
    %355 = vmatpush.msra.mxu0 %v233
    %356 = vmatpush.msra.mxu0 %v230
    %357 = vmatpush.msra.mxu0 %v227
    %358 = vmatpush.msra.mxu0 %v224
    %359 = vmatpush.msra.mxu0 %v221
    %360 = vmatpush.msra.mxu0 %v218
    %361 = vmatpush.msra.mxu0 %v215
    %362 = vmatmul.f32.gmra.mxu0 %v265
    %v363 = vpop.f32.mrf.mxu0
    %v364 = vadd.f32 %v263, %v363
    %365 = vdwg.mxu0
    %v366 = vmul.f32 %v325, %v364
    %v367 = vadd.f32 %v190, %v366
    %v368 = vtanh.pop %v367
    %v369 = vsub.f32 1.0, %v345
    %v370 = vmul.f32 %v369, %v368
    %v371 = vmul.f32 %v345, %v265
    %v372 = vadd.f32 %v370, %v371
    %373 = vst [vmem:[%s5] sm:$0xff] %v372
    %374 = vmatpush.msra.mxu0 %v258
    %375 = vmatpush.msra.mxu0 %v255
    %376 = vmatpush.msra.mxu0 %v252
    %377 = vmatpush.msra.mxu0 %v249
    %378 = vmatpush.msra.mxu0 %v246
    %379 = vmatpush.msra.mxu0 %v243
    %380 = vmatpush.msra.mxu0 %v240
    %381 = vmatpush.msra.mxu0 %v237
    %382 = vmatpush.msra.mxu0 %v234
    %383 = vmatpush.msra.mxu0 %v231
    %384 = vmatpush.msra.mxu0 %v228
    %385 = vmatpush.msra.mxu0 %v225
    %386 = vmatpush.msra.mxu0 %v222
    %387 = vmatpush.msra.mxu0 %v219
    %388 = vmatpush.msra.mxu0 %v216
    %389 = vmatpush.msra.mxu0 %v213
    %390 = vmatmul.f32.gmra.mxu0 %v372
    %v391 = vpop.f32.mrf.mxu0
    %v392 = vadd.f32 0.0, %v391
    %393 = vdwg.mxu0
    %394 = vmatpush.msra.mxu0 %v259
    %395 = vmatpush.msra.mxu0 %v256
    %396 = vmatpush.msra.mxu0 %v253
    %397 = vmatpush.msra.mxu0 %v250
    %398 = vmatpush.msra.mxu0 %v247
    %399 = vmatpush.msra.mxu0 %v244
    %400 = vmatpush.msra.mxu0 %v241
    %401 = vmatpush.msra.mxu0 %v238
    %402 = vmatpush.msra.mxu0 %v235
    %403 = vmatpush.msra.mxu0 %v232
    %404 = vmatpush.msra.mxu0 %v229
    %405 = vmatpush.msra.mxu0 %v226
    %406 = vmatpush.msra.mxu0 %v223
    %407 = vmatpush.msra.mxu0 %v220
    %408 = vmatpush.msra.mxu0 %v217
    %409 = vmatpush.msra.mxu0 %v214
    %410 = vmatmul.f32.gmra.mxu0 %v372
    %v411 = vpop.f32.mrf.mxu0
    %v412 = vadd.f32 0.0, %v411
    %413 = vdwg.mxu0
    %v414 = vadd.f32 %v111, %v392
    %v415 = vxor.u32 %v414, 2147483648
    %v416 = vmul.f32 %v415, 1.442695
    %v417 = vpow.pop %v416
    %v418 = vadd.f32 %v417, 1.0
    %v419 = vrcp.pop %v418
    %v420 = vmul.f32 %v418, %v419
    %v421 = vsub.f32 1.0, %v420
    %v422 = vmul.f32 %v419, %v421
    %v423 = vadd.f32 %v419, %v422
    %vm424 = vweird.f32 %v418
    %vm425 = vweird.f32 %v419
    %vm426 = vmor %vm424, %vm425
    %v427 = vsel %vm426, %v419, %v423
    %v428 = vand.u32 2147483647, %v418
    %vm429 = vcmp.eq.f32.partialorder %v428, 8.507059e+37
    %v430 = vand.u32 %v418, 2147483648
    %v431 = vor.u32 1.1754944e-38, %v430
    %v432 = vsel %vm429, %v431, %v427
    %v433 = vmul.f32 1.0, %v432
    %v434 = vadd.f32 %v152, %v412
    %v435 = vxor.u32 %v434, 2147483648
    %v436 = vmul.f32 %v435, 1.442695
    %v437 = vpow.pop %v436
    %v438 = vadd.f32 %v437, 1.0
    %v439 = vrcp.pop %v438
    %v440 = vmul.f32 %v438, %v439
    %v441 = vsub.f32 1.0, %v440
    %v442 = vmul.f32 %v439, %v441
    %v443 = vadd.f32 %v439, %v442
    %vm444 = vweird.f32 %v438
    %vm445 = vweird.f32 %v439
    %vm446 = vmor %vm444, %vm445
    %v447 = vsel %vm446, %v439, %v443
    %v448 = vand.u32 2147483647, %v438
    %vm449 = vcmp.eq.f32.partialorder %v448, 8.507059e+37
    %v450 = vand.u32 %v438, 2147483648
    %v451 = vor.u32 1.1754944e-38, %v450
    %v452 = vsel %vm449, %v451, %v447
    %v453 = vmul.f32 1.0, %v452
    %454 = vmatpush.msra.mxu0 %v260
    %455 = vmatpush.msra.mxu0 %v257
    %456 = vmatpush.msra.mxu0 %v254
    %457 = vmatpush.msra.mxu0 %v251
    %458 = vmatpush.msra.mxu0 %v248
    %459 = vmatpush.msra.mxu0 %v245
    %460 = vmatpush.msra.mxu0 %v242
    %461 = vmatpush.msra.mxu0 %v239
    %462 = vmatpush.msra.mxu0 %v236
    %463 = vmatpush.msra.mxu0 %v233
    %464 = vmatpush.msra.mxu0 %v230
    %465 = vmatpush.msra.mxu0 %v227
    %466 = vmatpush.msra.mxu0 %v224
    %467 = vmatpush.msra.mxu0 %v221
    %468 = vmatpush.msra.mxu0 %v218
    %469 = vmatpush.msra.mxu0 %v215
    %470 = vmatmul.f32.gmra.mxu0 %v372
    %v471 = vpop.f32.mrf.mxu0
    %v472 = vadd.f32 %v263, %v471
    %473 = vdwg.mxu0
    %v474 = vmul.f32 %v433, %v472
    %v475 = vadd.f32 %v193, %v474
    %v476 = vtanh.pop %v475
    %v477 = vsub.f32 1.0, %v453
    %v478 = vmul.f32 %v477, %v476
    %v479 = vmul.f32 %v453, %v372
    %v480 = vadd.f32 %v478, %v479
    %s481 = scalar_lea.vmem %s5, 8
    %482 = vst [vmem:[%s481] sm:$0xff] %v480
    %483 = vmatpush.msra.mxu0 %v258
    %484 = vmatpush.msra.mxu0 %v255
    %485 = vmatpush.msra.mxu0 %v252
    %486 = vmatpush.msra.mxu0 %v249
    %487 = vmatpush.msra.mxu0 %v246
    %488 = vmatpush.msra.mxu0 %v243
    %489 = vmatpush.msra.mxu0 %v240
    %490 = vmatpush.msra.mxu0 %v237
    %491 = vmatpush.msra.mxu0 %v234
    %492 = vmatpush.msra.mxu0 %v231
    %493 = vmatpush.msra.mxu0 %v228
    %494 = vmatpush.msra.mxu0 %v225
    %495 = vmatpush.msra.mxu0 %v222
    %496 = vmatpush.msra.mxu0 %v219
    %497 = vmatpush.msra.mxu0 %v216
    %498 = vmatpush.msra.mxu0 %v213
    %499 = vmatmul.f32.gmra.mxu0 %v480
    %v500 = vpop.f32.mrf.mxu0
    %v501 = vadd.f32 0.0, %v500
    %502 = vdwg.mxu0
    %503 = vmatpush.msra.mxu0 %v259
    %504 = vmatpush.msra.mxu0 %v256
    %505 = vmatpush.msra.mxu0 %v253
    %506 = vmatpush.msra.mxu0 %v250
    %507 = vmatpush.msra.mxu0 %v247
    %508 = vmatpush.msra.mxu0 %v244
    %509 = vmatpush.msra.mxu0 %v241
    %510 = vmatpush.msra.mxu0 %v238
    %511 = vmatpush.msra.mxu0 %v235
    %512 = vmatpush.msra.mxu0 %v232
    %513 = vmatpush.msra.mxu0 %v229
    %514 = vmatpush.msra.mxu0 %v226
    %515 = vmatpush.msra.mxu0 %v223
    %516 = vmatpush.msra.mxu0 %v220
    %517 = vmatpush.msra.mxu0 %v217
    %518 = vmatpush.msra.mxu0 %v214
    %519 = vmatmul.f32.gmra.mxu0 %v480
    %v520 = vpop.f32.mrf.mxu0
    %v521 = vadd.f32 0.0, %v520
    %522 = vdwg.mxu0
    %v523 = vadd.f32 %v114, %v501
    %v524 = vxor.u32 %v523, 2147483648
    %v525 = vmul.f32 %v524, 1.442695
    %v526 = vpow.pop %v525
    %v527 = vadd.f32 %v526, 1.0
    %v528 = vrcp.pop %v527
    %v529 = vmul.f32 %v527, %v528
    %v530 = vsub.f32 1.0, %v529
    %v531 = vmul.f32 %v528, %v530
    %v532 = vadd.f32 %v528, %v531
    %vm533 = vweird.f32 %v527
    %vm534 = vweird.f32 %v528
    %vm535 = vmor %vm533, %vm534
    %v536 = vsel %vm535, %v528, %v532
    %v537 = vand.u32 2147483647, %v527
    %vm538 = vcmp.eq.f32.partialorder %v537, 8.507059e+37
    %v539 = vand.u32 %v527, 2147483648
    %v540 = vor.u32 1.1754944e-38, %v539
    %v541 = vsel %vm538, %v540, %v536
    %v542 = vmul.f32 1.0, %v541
    %v543 = vadd.f32 %v155, %v521
    %v544 = vxor.u32 %v543, 2147483648
    %v545 = vmul.f32 %v544, 1.442695
    %v546 = vpow.pop %v545
    %v547 = vadd.f32 %v546, 1.0
    %v548 = vrcp.pop %v547
    %v549 = vmul.f32 %v547, %v548
    %v550 = vsub.f32 1.0, %v549
    %v551 = vmul.f32 %v548, %v550
    %v552 = vadd.f32 %v548, %v551
    %vm553 = vweird.f32 %v547
    %vm554 = vweird.f32 %v548
    %vm555 = vmor %vm553, %vm554
    %v556 = vsel %vm555, %v548, %v552
    %v557 = vand.u32 2147483647, %v547
    %vm558 = vcmp.eq.f32.partialorder %v557, 8.507059e+37
    %v559 = vand.u32 %v547, 2147483648
    %v560 = vor.u32 1.1754944e-38, %v559
    %v561 = vsel %vm558, %v560, %v556
    %v562 = vmul.f32 1.0, %v561
    %563 = vmatpush.msra.mxu0 %v260
    %564 = vmatpush.msra.mxu0 %v257
    %565 = vmatpush.msra.mxu0 %v254
    %566 = vmatpush.msra.mxu0 %v251
    %567 = vmatpush.msra.mxu0 %v248
    %568 = vmatpush.msra.mxu0 %v245
    %569 = vmatpush.msra.mxu0 %v242
    %570 = vmatpush.msra.mxu0 %v239
    %571 = vmatpush.msra.mxu0 %v236
    %572 = vmatpush.msra.mxu0 %v233
    %573 = vmatpush.msra.mxu0 %v230
    %574 = vmatpush.msra.mxu0 %v227
    %575 = vmatpush.msra.mxu0 %v224
    %576 = vmatpush.msra.mxu0 %v221
    %577 = vmatpush.msra.mxu0 %v218
    %578 = vmatpush.msra.mxu0 %v215
    %579 = vmatmul.f32.gmra.mxu0 %v480
    %v580 = vpop.f32.mrf.mxu0
    %v581 = vadd.f32 %v263, %v580
    %582 = vdwg.mxu0
    %v583 = vmul.f32 %v542, %v581
    %v584 = vadd.f32 %v196, %v583
    %v585 = vtanh.pop %v584
    %v586 = vsub.f32 1.0, %v562
    %v587 = vmul.f32 %v586, %v585
    %v588 = vmul.f32 %v562, %v480
    %v589 = vadd.f32 %v587, %v588
    %s590 = scalar_lea.vmem %s5, 16
    %591 = vst [vmem:[%s590] sm:$0xff] %v589
    %592 = vmatpush.msra.mxu0 %v258
    %593 = vmatpush.msra.mxu0 %v255
    %594 = vmatpush.msra.mxu0 %v252
    %595 = vmatpush.msra.mxu0 %v249
    %596 = vmatpush.msra.mxu0 %v246
    %597 = vmatpush.msra.mxu0 %v243
    %598 = vmatpush.msra.mxu0 %v240
    %599 = vmatpush.msra.mxu0 %v237
    %600 = vmatpush.msra.mxu0 %v234
    %601 = vmatpush.msra.mxu0 %v231
    %602 = vmatpush.msra.mxu0 %v228
    %603 = vmatpush.msra.mxu0 %v225
    %604 = vmatpush.msra.mxu0 %v222
    %605 = vmatpush.msra.mxu0 %v219
    %606 = vmatpush.msra.mxu0 %v216
    %607 = vmatpush.msra.mxu0 %v213
    %608 = vmatmul.f32.gmra.mxu0 %v589
    %v609 = vpop.f32.mrf.mxu0
    %v610 = vadd.f32 0.0, %v609
    %611 = vdwg.mxu0
    %612 = vmatpush.msra.mxu0 %v259
    %613 = vmatpush.msra.mxu0 %v256
    %614 = vmatpush.msra.mxu0 %v253
    %615 = vmatpush.msra.mxu0 %v250
    %616 = vmatpush.msra.mxu0 %v247
    %617 = vmatpush.msra.mxu0 %v244
    %618 = vmatpush.msra.mxu0 %v241
    %619 = vmatpush.msra.mxu0 %v238
    %620 = vmatpush.msra.mxu0 %v235
    %621 = vmatpush.msra.mxu0 %v232
    %622 = vmatpush.msra.mxu0 %v229
    %623 = vmatpush.msra.mxu0 %v226
    %624 = vmatpush.msra.mxu0 %v223
    %625 = vmatpush.msra.mxu0 %v220
    %626 = vmatpush.msra.mxu0 %v217
    %627 = vmatpush.msra.mxu0 %v214
    %628 = vmatmul.f32.gmra.mxu0 %v589
    %v629 = vpop.f32.mrf.mxu0
    %v630 = vadd.f32 0.0, %v629
    %631 = vdwg.mxu0
    %v632 = vadd.f32 %v117, %v610
    %v633 = vxor.u32 %v632, 2147483648
    %v634 = vmul.f32 %v633, 1.442695
    %v635 = vpow.pop %v634
    %v636 = vadd.f32 %v635, 1.0
    %v637 = vrcp.pop %v636
    %v638 = vmul.f32 %v636, %v637
    %v639 = vsub.f32 1.0, %v638
    %v640 = vmul.f32 %v637, %v639
    %v641 = vadd.f32 %v637, %v640
    %vm642 = vweird.f32 %v636
    %vm643 = vweird.f32 %v637
    %vm644 = vmor %vm642, %vm643
    %v645 = vsel %vm644, %v637, %v641
    %v646 = vand.u32 2147483647, %v636
    %vm647 = vcmp.eq.f32.partialorder %v646, 8.507059e+37
    %v648 = vand.u32 %v636, 2147483648
    %v649 = vor.u32 1.1754944e-38, %v648
    %v650 = vsel %vm647, %v649, %v645
    %v651 = vmul.f32 1.0, %v650
    %v652 = vadd.f32 %v158, %v630
    %v653 = vxor.u32 %v652, 2147483648
    %v654 = vmul.f32 %v653, 1.442695
    %v655 = vpow.pop %v654
    %v656 = vadd.f32 %v655, 1.0
    %v657 = vrcp.pop %v656
    %v658 = vmul.f32 %v656, %v657
    %v659 = vsub.f32 1.0, %v658
    %v660 = vmul.f32 %v657, %v659
    %v661 = vadd.f32 %v657, %v660
    %vm662 = vweird.f32 %v656
    %vm663 = vweird.f32 %v657
    %vm664 = vmor %vm662, %vm663
    %v665 = vsel %vm664, %v657, %v661
    %v666 = vand.u32 2147483647, %v656
    %vm667 = vcmp.eq.f32.partialorder %v666, 8.507059e+37
    %v668 = vand.u32 %v656, 2147483648
    %v669 = vor.u32 1.1754944e-38, %v668
    %v670 = vsel %vm667, %v669, %v665
    %v671 = vmul.f32 1.0, %v670
    %672 = vmatpush.msra.mxu0 %v260
    %673 = vmatpush.msra.mxu0 %v257
    %674 = vmatpush.msra.mxu0 %v254
    %675 = vmatpush.msra.mxu0 %v251
    %676 = vmatpush.msra.mxu0 %v248
    %677 = vmatpush.msra.mxu0 %v245
    %678 = vmatpush.msra.mxu0 %v242
    %679 = vmatpush.msra.mxu0 %v239
    %680 = vmatpush.msra.mxu0 %v236
    %681 = vmatpush.msra.mxu0 %v233
    %682 = vmatpush.msra.mxu0 %v230
    %683 = vmatpush.msra.mxu0 %v227
    %684 = vmatpush.msra.mxu0 %v224
    %685 = vmatpush.msra.mxu0 %v221
    %686 = vmatpush.msra.mxu0 %v218
    %687 = vmatpush.msra.mxu0 %v215
    %688 = vmatmul.f32.gmra.mxu0 %v589
    %v689 = vpop.f32.mrf.mxu0
    %v690 = vadd.f32 %v263, %v689
    %691 = vdwg.mxu0
    %v692 = vmul.f32 %v651, %v690
    %v693 = vadd.f32 %v199, %v692
    %v694 = vtanh.pop %v693
    %v695 = vsub.f32 1.0, %v671
    %v696 = vmul.f32 %v695, %v694
    %v697 = vmul.f32 %v671, %v589
    %v698 = vadd.f32 %v696, %v697
    %s699 = scalar_lea.vmem %s5, 24
    %700 = vst [vmem:[%s699] sm:$0xff] %v698
    %701 = vmatpush.msra.mxu0 %v258
    %702 = vmatpush.msra.mxu0 %v255
    %703 = vmatpush.msra.mxu0 %v252
    %704 = vmatpush.msra.mxu0 %v249
    %705 = vmatpush.msra.mxu0 %v246
    %706 = vmatpush.msra.mxu0 %v243
    %707 = vmatpush.msra.mxu0 %v240
    %708 = vmatpush.msra.mxu0 %v237
    %709 = vmatpush.msra.mxu0 %v234
    %710 = vmatpush.msra.mxu0 %v231
    %711 = vmatpush.msra.mxu0 %v228
    %712 = vmatpush.msra.mxu0 %v225
    %713 = vmatpush.msra.mxu0 %v222
    %714 = vmatpush.msra.mxu0 %v219
    %715 = vmatpush.msra.mxu0 %v216
    %716 = vmatpush.msra.mxu0 %v213
    %717 = vmatmul.f32.gmra.mxu0 %v698
    %v718 = vpop.f32.mrf.mxu0
    %v719 = vadd.f32 0.0, %v718
    %720 = vdwg.mxu0
    %721 = vmatpush.msra.mxu0 %v259
    %722 = vmatpush.msra.mxu0 %v256
    %723 = vmatpush.msra.mxu0 %v253
    %724 = vmatpush.msra.mxu0 %v250
    %725 = vmatpush.msra.mxu0 %v247
    %726 = vmatpush.msra.mxu0 %v244
    %727 = vmatpush.msra.mxu0 %v241
    %728 = vmatpush.msra.mxu0 %v238
    %729 = vmatpush.msra.mxu0 %v235
    %730 = vmatpush.msra.mxu0 %v232
    %731 = vmatpush.msra.mxu0 %v229
    %732 = vmatpush.msra.mxu0 %v226
    %733 = vmatpush.msra.mxu0 %v223
    %734 = vmatpush.msra.mxu0 %v220
    %735 = vmatpush.msra.mxu0 %v217
    %736 = vmatpush.msra.mxu0 %v214
    %737 = vmatmul.f32.gmra.mxu0 %v698
    %v738 = vpop.f32.mrf.mxu0
    %v739 = vadd.f32 0.0, %v738
    %740 = vdwg.mxu0
    %v741 = vadd.f32 %v120, %v719
    %v742 = vxor.u32 %v741, 2147483648
    %v743 = vmul.f32 %v742, 1.442695
    %v744 = vpow.pop %v743
    %v745 = vadd.f32 %v744, 1.0
    %v746 = vrcp.pop %v745
    %v747 = vmul.f32 %v745, %v746
    %v748 = vsub.f32 1.0, %v747
    %v749 = vmul.f32 %v746, %v748
    %v750 = vadd.f32 %v746, %v749
    %vm751 = vweird.f32 %v745
    %vm752 = vweird.f32 %v746
    %vm753 = vmor %vm751, %vm752
    %v754 = vsel %vm753, %v746, %v750
    %v755 = vand.u32 2147483647, %v745
    %vm756 = vcmp.eq.f32.partialorder %v755, 8.507059e+37
    %v757 = vand.u32 %v745, 2147483648
    %v758 = vor.u32 1.1754944e-38, %v757
    %v759 = vsel %vm756, %v758, %v754
    %v760 = vmul.f32 1.0, %v759
    %v761 = vadd.f32 %v161, %v739
    %v762 = vxor.u32 %v761, 2147483648
    %v763 = vmul.f32 %v762, 1.442695
    %v764 = vpow.pop %v763
    %v765 = vadd.f32 %v764, 1.0
    %v766 = vrcp.pop %v765
    %v767 = vmul.f32 %v765, %v766
    %v768 = vsub.f32 1.0, %v767
    %v769 = vmul.f32 %v766, %v768
    %v770 = vadd.f32 %v766, %v769
    %vm771 = vweird.f32 %v765
    %vm772 = vweird.f32 %v766
    %vm773 = vmor %vm771, %vm772
    %v774 = vsel %vm773, %v766, %v770
    %v775 = vand.u32 2147483647, %v765
    %vm776 = vcmp.eq.f32.partialorder %v775, 8.507059e+37
    %v777 = vand.u32 %v765, 2147483648
    %v778 = vor.u32 1.1754944e-38, %v777
    %v779 = vsel %vm776, %v778, %v774
    %v780 = vmul.f32 1.0, %v779
    %781 = vmatpush.msra.mxu0 %v260
    %782 = vmatpush.msra.mxu0 %v257
    %783 = vmatpush.msra.mxu0 %v254
    %784 = vmatpush.msra.mxu0 %v251
    %785 = vmatpush.msra.mxu0 %v248
    %786 = vmatpush.msra.mxu0 %v245
    %787 = vmatpush.msra.mxu0 %v242
    %788 = vmatpush.msra.mxu0 %v239
    %789 = vmatpush.msra.mxu0 %v236
    %790 = vmatpush.msra.mxu0 %v233
    %791 = vmatpush.msra.mxu0 %v230
    %792 = vmatpush.msra.mxu0 %v227
    %793 = vmatpush.msra.mxu0 %v224
    %794 = vmatpush.msra.mxu0 %v221
    %795 = vmatpush.msra.mxu0 %v218
    %796 = vmatpush.msra.mxu0 %v215
    %797 = vmatmul.f32.gmra.mxu0 %v698
    %v798 = vpop.f32.mrf.mxu0
    %v799 = vadd.f32 %v263, %v798
    %800 = vdwg.mxu0
    %v801 = vmul.f32 %v760, %v799
    %v802 = vadd.f32 %v202, %v801
    %v803 = vtanh.pop %v802
    %v804 = vsub.f32 1.0, %v780
    %v805 = vmul.f32 %v804, %v803
    %v806 = vmul.f32 %v780, %v698
    %v807 = vadd.f32 %v805, %v806
    %s808 = scalar_lea.vmem %s5, 32
    %809 = vst [vmem:[%s808] sm:$0xff] %v807
    %810 = vmatpush.msra.mxu0 %v258
    %811 = vmatpush.msra.mxu0 %v255
    %812 = vmatpush.msra.mxu0 %v252
    %813 = vmatpush.msra.mxu0 %v249
    %814 = vmatpush.msra.mxu0 %v246
    %815 = vmatpush.msra.mxu0 %v243
    %816 = vmatpush.msra.mxu0 %v240
    %817 = vmatpush.msra.mxu0 %v237
    %818 = vmatpush.msra.mxu0 %v234
    %819 = vmatpush.msra.mxu0 %v231
    %820 = vmatpush.msra.mxu0 %v228
    %821 = vmatpush.msra.mxu0 %v225
    %822 = vmatpush.msra.mxu0 %v222
    %823 = vmatpush.msra.mxu0 %v219
    %824 = vmatpush.msra.mxu0 %v216
    %825 = vmatpush.msra.mxu0 %v213
    %826 = vmatmul.f32.gmra.mxu0 %v807
    %v827 = vpop.f32.mrf.mxu0
    %v828 = vadd.f32 0.0, %v827
    %829 = vdwg.mxu0
    %830 = vmatpush.msra.mxu0 %v259
    %831 = vmatpush.msra.mxu0 %v256
    %832 = vmatpush.msra.mxu0 %v253
    %833 = vmatpush.msra.mxu0 %v250
    %834 = vmatpush.msra.mxu0 %v247
    %835 = vmatpush.msra.mxu0 %v244
    %836 = vmatpush.msra.mxu0 %v241
    %837 = vmatpush.msra.mxu0 %v238
    %838 = vmatpush.msra.mxu0 %v235
    %839 = vmatpush.msra.mxu0 %v232
    %840 = vmatpush.msra.mxu0 %v229
    %841 = vmatpush.msra.mxu0 %v226
    %842 = vmatpush.msra.mxu0 %v223
    %843 = vmatpush.msra.mxu0 %v220
    %844 = vmatpush.msra.mxu0 %v217
    %845 = vmatpush.msra.mxu0 %v214
    %846 = vmatmul.f32.gmra.mxu0 %v807
    %v847 = vpop.f32.mrf.mxu0
    %v848 = vadd.f32 0.0, %v847
    %849 = vdwg.mxu0
    %v850 = vadd.f32 %v123, %v828
    %v851 = vxor.u32 %v850, 2147483648
    %v852 = vmul.f32 %v851, 1.442695
    %v853 = vpow.pop %v852
    %v854 = vadd.f32 %v853, 1.0
    %v855 = vrcp.pop %v854
    %v856 = vmul.f32 %v854, %v855
    %v857 = vsub.f32 1.0, %v856
    %v858 = vmul.f32 %v855, %v857
    %v859 = vadd.f32 %v855, %v858
    %vm860 = vweird.f32 %v854
    %vm861 = vweird.f32 %v855
    %vm862 = vmor %vm860, %vm861
    %v863 = vsel %vm862, %v855, %v859
    %v864 = vand.u32 2147483647, %v854
    %vm865 = vcmp.eq.f32.partialorder %v864, 8.507059e+37
    %v866 = vand.u32 %v854, 2147483648
    %v867 = vor.u32 1.1754944e-38, %v866
    %v868 = vsel %vm865, %v867, %v863
    %v869 = vmul.f32 1.0, %v868
    %v870 = vadd.f32 %v164, %v848
    %v871 = vxor.u32 %v870, 2147483648
    %v872 = vmul.f32 %v871, 1.442695
    %v873 = vpow.pop %v872
    %v874 = vadd.f32 %v873, 1.0
    %v875 = vrcp.pop %v874
    %v876 = vmul.f32 %v874, %v875
    %v877 = vsub.f32 1.0, %v876
    %v878 = vmul.f32 %v875, %v877
    %v879 = vadd.f32 %v875, %v878
    %vm880 = vweird.f32 %v874
    %vm881 = vweird.f32 %v875
    %vm882 = vmor %vm880, %vm881
    %v883 = vsel %vm882, %v875, %v879
    %v884 = vand.u32 2147483647, %v874
    %vm885 = vcmp.eq.f32.partialorder %v884, 8.507059e+37
    %v886 = vand.u32 %v874, 2147483648
    %v887 = vor.u32 1.1754944e-38, %v886
    %v888 = vsel %vm885, %v887, %v883
    %v889 = vmul.f32 1.0, %v888
    %890 = vmatpush.msra.mxu0 %v260
    %891 = vmatpush.msra.mxu0 %v257
    %892 = vmatpush.msra.mxu0 %v254
    %893 = vmatpush.msra.mxu0 %v251
    %894 = vmatpush.msra.mxu0 %v248
    %895 = vmatpush.msra.mxu0 %v245
    %896 = vmatpush.msra.mxu0 %v242
    %897 = vmatpush.msra.mxu0 %v239
    %898 = vmatpush.msra.mxu0 %v236
    %899 = vmatpush.msra.mxu0 %v233
    %900 = vmatpush.msra.mxu0 %v230
    %901 = vmatpush.msra.mxu0 %v227
    %902 = vmatpush.msra.mxu0 %v224
    %903 = vmatpush.msra.mxu0 %v221
    %904 = vmatpush.msra.mxu0 %v218
    %905 = vmatpush.msra.mxu0 %v215
    %906 = vmatmul.f32.gmra.mxu0 %v807
    %v907 = vpop.f32.mrf.mxu0
    %v908 = vadd.f32 %v263, %v907
    %909 = vdwg.mxu0
    %v910 = vmul.f32 %v869, %v908
    %v911 = vadd.f32 %v205, %v910
    %v912 = vtanh.pop %v911
    %v913 = vsub.f32 1.0, %v889
    %v914 = vmul.f32 %v913, %v912
    %v915 = vmul.f32 %v889, %v807
    %v916 = vadd.f32 %v914, %v915
    %s917 = scalar_lea.vmem %s5, 40
    %918 = vst [vmem:[%s917] sm:$0xff] %v916
    %919 = vmatpush.msra.mxu0 %v258
    %920 = vmatpush.msra.mxu0 %v255
    %921 = vmatpush.msra.mxu0 %v252
    %922 = vmatpush.msra.mxu0 %v249
    %923 = vmatpush.msra.mxu0 %v246
    %924 = vmatpush.msra.mxu0 %v243
    %925 = vmatpush.msra.mxu0 %v240
    %926 = vmatpush.msra.mxu0 %v237
    %927 = vmatpush.msra.mxu0 %v234
    %928 = vmatpush.msra.mxu0 %v231
    %929 = vmatpush.msra.mxu0 %v228
    %930 = vmatpush.msra.mxu0 %v225
    %931 = vmatpush.msra.mxu0 %v222
    %932 = vmatpush.msra.mxu0 %v219
    %933 = vmatpush.msra.mxu0 %v216
    %934 = vmatpush.msra.mxu0 %v213
    %935 = vmatmul.f32.gmra.mxu0 %v916
    %v936 = vpop.f32.mrf.mxu0
    %v937 = vadd.f32 0.0, %v936
    %938 = vdwg.mxu0
    %939 = vmatpush.msra.mxu0 %v259
    %940 = vmatpush.msra.mxu0 %v256
    %941 = vmatpush.msra.mxu0 %v253
    %942 = vmatpush.msra.mxu0 %v250
    %943 = vmatpush.msra.mxu0 %v247
    %944 = vmatpush.msra.mxu0 %v244
    %945 = vmatpush.msra.mxu0 %v241
    %946 = vmatpush.msra.mxu0 %v238
    %947 = vmatpush.msra.mxu0 %v235
    %948 = vmatpush.msra.mxu0 %v232
    %949 = vmatpush.msra.mxu0 %v229
    %950 = vmatpush.msra.mxu0 %v226
    %951 = vmatpush.msra.mxu0 %v223
    %952 = vmatpush.msra.mxu0 %v220
    %953 = vmatpush.msra.mxu0 %v217
    %954 = vmatpush.msra.mxu0 %v214
    %955 = vmatmul.f32.gmra.mxu0 %v916
    %v956 = vpop.f32.mrf.mxu0
    %v957 = vadd.f32 0.0, %v956
    %958 = vdwg.mxu0
    %v959 = vadd.f32 %v126, %v937
    %v960 = vxor.u32 %v959, 2147483648
    %v961 = vmul.f32 %v960, 1.442695
    %v962 = vpow.pop %v961
    %v963 = vadd.f32 %v962, 1.0
    %v964 = vrcp.pop %v963
    %v965 = vmul.f32 %v963, %v964
    %v966 = vsub.f32 1.0, %v965
    %v967 = vmul.f32 %v964, %v966
    %v968 = vadd.f32 %v964, %v967
    %vm969 = vweird.f32 %v963
    %vm970 = vweird.f32 %v964
    %vm971 = vmor %vm969, %vm970
    %v972 = vsel %vm971, %v964, %v968
    %v973 = vand.u32 2147483647, %v963
    %vm974 = vcmp.eq.f32.partialorder %v973, 8.507059e+37
    %v975 = vand.u32 %v963, 2147483648
    %v976 = vor.u32 1.1754944e-38, %v975
    %v977 = vsel %vm974, %v976, %v972
    %v978 = vmul.f32 1.0, %v977
    %v979 = vadd.f32 %v167, %v957
    %v980 = vxor.u32 %v979, 2147483648
    %v981 = vmul.f32 %v980, 1.442695
    %v982 = vpow.pop %v981
    %v983 = vadd.f32 %v982, 1.0
    %v984 = vrcp.pop %v983
    %v985 = vmul.f32 %v983, %v984
    %v986 = vsub.f32 1.0, %v985
    %v987 = vmul.f32 %v984, %v986
    %v988 = vadd.f32 %v984, %v987
    %vm989 = vweird.f32 %v983
    %vm990 = vweird.f32 %v984
    %vm991 = vmor %vm989, %vm990
    %v992 = vsel %vm991, %v984, %v988
    %v993 = vand.u32 2147483647, %v983
    %vm994 = vcmp.eq.f32.partialorder %v993, 8.507059e+37
    %v995 = vand.u32 %v983, 2147483648
    %v996 = vor.u32 1.1754944e-38, %v995
    %v997 = vsel %vm994, %v996, %v992
    %v998 = vmul.f32 1.0, %v997
    %999 = vmatpush.msra.mxu0 %v260
    %1000 = vmatpush.msra.mxu0 %v257
    %1001 = vmatpush.msra.mxu0 %v254
    %1002 = vmatpush.msra.mxu0 %v251
    %1003 = vmatpush.msra.mxu0 %v248
    %1004 = vmatpush.msra.mxu0 %v245
    %1005 = vmatpush.msra.mxu0 %v242
    %1006 = vmatpush.msra.mxu0 %v239
    %1007 = vmatpush.msra.mxu0 %v236
    %1008 = vmatpush.msra.mxu0 %v233
    %1009 = vmatpush.msra.mxu0 %v230
    %1010 = vmatpush.msra.mxu0 %v227
    %1011 = vmatpush.msra.mxu0 %v224
    %1012 = vmatpush.msra.mxu0 %v221
    %1013 = vmatpush.msra.mxu0 %v218
    %1014 = vmatpush.msra.mxu0 %v215
    %1015 = vmatmul.f32.gmra.mxu0 %v916
    %v1016 = vpop.f32.mrf.mxu0
    %v1017 = vadd.f32 %v263, %v1016
    %1018 = vdwg.mxu0
    %v1019 = vmul.f32 %v978, %v1017
    %v1020 = vadd.f32 %v208, %v1019
    %v1021 = vtanh.pop %v1020
    %v1022 = vsub.f32 1.0, %v998
    %v1023 = vmul.f32 %v1022, %v1021
    %v1024 = vmul.f32 %v998, %v916
    %v1025 = vadd.f32 %v1023, %v1024
    %s1026 = scalar_lea.vmem %s5, 48
    %1027 = vst [vmem:[%s1026] sm:$0xff] %v1025
    %1028 = vmatpush.msra.mxu0 %v258
    %1029 = vmatpush.msra.mxu0 %v255
    %1030 = vmatpush.msra.mxu0 %v252
    %1031 = vmatpush.msra.mxu0 %v249
    %1032 = vmatpush.msra.mxu0 %v246
    %1033 = vmatpush.msra.mxu0 %v243
    %1034 = vmatpush.msra.mxu0 %v240
    %1035 = vmatpush.msra.mxu0 %v237
    %1036 = vmatpush.msra.mxu0 %v234
    %1037 = vmatpush.msra.mxu0 %v231
    %1038 = vmatpush.msra.mxu0 %v228
    %1039 = vmatpush.msra.mxu0 %v225
    %1040 = vmatpush.msra.mxu0 %v222
    %1041 = vmatpush.msra.mxu0 %v219
    %1042 = vmatpush.msra.mxu0 %v216
    %1043 = vmatpush.msra.mxu0 %v213
    %1044 = vmatmul.f32.gmra.mxu0 %v1025
    %v1045 = vpop.f32.mrf.mxu0
    %v1046 = vadd.f32 0.0, %v1045
    %1047 = vdwg.mxu0
    %1048 = vmatpush.msra.mxu0 %v259
    %1049 = vmatpush.msra.mxu0 %v256
    %1050 = vmatpush.msra.mxu0 %v253
    %1051 = vmatpush.msra.mxu0 %v250
    %1052 = vmatpush.msra.mxu0 %v247
    %1053 = vmatpush.msra.mxu0 %v244
    %1054 = vmatpush.msra.mxu0 %v241
    %1055 = vmatpush.msra.mxu0 %v238
    %1056 = vmatpush.msra.mxu0 %v235
    %1057 = vmatpush.msra.mxu0 %v232
    %1058 = vmatpush.msra.mxu0 %v229
    %1059 = vmatpush.msra.mxu0 %v226
    %1060 = vmatpush.msra.mxu0 %v223
    %1061 = vmatpush.msra.mxu0 %v220
    %1062 = vmatpush.msra.mxu0 %v217
    %1063 = vmatpush.msra.mxu0 %v214
    %1064 = vmatmul.f32.gmra.mxu0 %v1025
    %v1065 = vpop.f32.mrf.mxu0
    %v1066 = vadd.f32 0.0, %v1065
    %1067 = vdwg.mxu0
    %v1068 = vadd.f32 %v129, %v1046
    %v1069 = vxor.u32 %v1068, 2147483648
    %v1070 = vmul.f32 %v1069, 1.442695
    %v1071 = vpow.pop %v1070
    %v1072 = vadd.f32 %v1071, 1.0
    %v1073 = vrcp.pop %v1072
    %v1074 = vmul.f32 %v1072, %v1073
    %v1075 = vsub.f32 1.0, %v1074
    %v1076 = vmul.f32 %v1073, %v1075
    %v1077 = vadd.f32 %v1073, %v1076
    %vm1078 = vweird.f32 %v1072
    %vm1079 = vweird.f32 %v1073
    %vm1080 = vmor %vm1078, %vm1079
    %v1081 = vsel %vm1080, %v1073, %v1077
    %v1082 = vand.u32 2147483647, %v1072
    %vm1083 = vcmp.eq.f32.partialorder %v1082, 8.507059e+37
    %v1084 = vand.u32 %v1072, 2147483648
    %v1085 = vor.u32 1.1754944e-38, %v1084
    %v1086 = vsel %vm1083, %v1085, %v1081
    %v1087 = vmul.f32 1.0, %v1086
    %v1088 = vadd.f32 %v170, %v1066
    %v1089 = vxor.u32 %v1088, 2147483648
    %v1090 = vmul.f32 %v1089, 1.442695
    %v1091 = vpow.pop %v1090
    %v1092 = vadd.f32 %v1091, 1.0
    %v1093 = vrcp.pop %v1092
    %v1094 = vmul.f32 %v1092, %v1093
    %v1095 = vsub.f32 1.0, %v1094
    %v1096 = vmul.f32 %v1093, %v1095
    %v1097 = vadd.f32 %v1093, %v1096
    %vm1098 = vweird.f32 %v1092
    %vm1099 = vweird.f32 %v1093
    %vm1100 = vmor %vm1098, %vm1099
    %v1101 = vsel %vm1100, %v1093, %v1097
    %v1102 = vand.u32 2147483647, %v1092
    %vm1103 = vcmp.eq.f32.partialorder %v1102, 8.507059e+37
    %v1104 = vand.u32 %v1092, 2147483648
    %v1105 = vor.u32 1.1754944e-38, %v1104
    %v1106 = vsel %vm1103, %v1105, %v1101
    %v1107 = vmul.f32 1.0, %v1106
    %1108 = vmatpush.msra.mxu0 %v260
    %1109 = vmatpush.msra.mxu0 %v257
    %1110 = vmatpush.msra.mxu0 %v254
    %1111 = vmatpush.msra.mxu0 %v251
    %1112 = vmatpush.msra.mxu0 %v248
    %1113 = vmatpush.msra.mxu0 %v245
    %1114 = vmatpush.msra.mxu0 %v242
    %1115 = vmatpush.msra.mxu0 %v239
    %1116 = vmatpush.msra.mxu0 %v236
    %1117 = vmatpush.msra.mxu0 %v233
    %1118 = vmatpush.msra.mxu0 %v230
    %1119 = vmatpush.msra.mxu0 %v227
    %1120 = vmatpush.msra.mxu0 %v224
    %1121 = vmatpush.msra.mxu0 %v221
    %1122 = vmatpush.msra.mxu0 %v218
    %1123 = vmatpush.msra.mxu0 %v215
    %1124 = vmatmul.f32.gmra.mxu0 %v1025
    %v1125 = vpop.f32.mrf.mxu0
    %v1126 = vadd.f32 %v263, %v1125
    %1127 = vdwg.mxu0
    %v1128 = vmul.f32 %v1087, %v1126
    %v1129 = vadd.f32 %v211, %v1128
    %v1130 = vtanh.pop %v1129
    %v1131 = vsub.f32 1.0, %v1107
    %v1132 = vmul.f32 %v1131, %v1130
    %v1133 = vmul.f32 %v1107, %v1025
    %v1134 = vadd.f32 %v1132, %v1133
    %s1135 = scalar_lea.vmem %s5, 56
    %1136 = vst [vmem:[%s1135] sm:$0xff] %v1134
    %1137 = vst [vmem:[#allocation2] sm:$0xff] %v1134
    // Predicated region
    $region30: #{encoder_forward.1} parent=1 // pred_check
      %p1138 = pneg %p38
    $region31: #{encoder_forward.1} parent=1 // pred_check_branch
      %1140 = sbr.rel (%p1138) target = $region33
    $region32: #{encoder_forward.1} parent=1 // pred_region
      %1141 = vst [vmem:[%s6] sm:$0xff] %v1134
    $region33: #{encoder_forward.1} parent=1 // pred_fallthru
      _
    // Predicated region
    $region34: #{encoder_forward.1} parent=1 // pred_check
      _
    $region35: #{encoder_forward.1} parent=1 // pred_check_branch
      %1143 = sbr.rel (0) target = $region37
    $region36: #{encoder_forward.1} parent=1 // pred_region
      _
    $region37: #{encoder_forward.1} parent=1 // pred_fallthru
      _
    // Predicated region
    $region38: #{encoder_forward.1} parent=1 // pred_check
      _
    $region39: #{encoder_forward.1} parent=1 // pred_check_branch
      %1145 = sbr.rel (0) target = $region41
    $region40: #{encoder_forward.1} parent=1 // pred_region
      _
    $region41: #{encoder_forward.1} parent=1 // pred_fallthru
      _
    // Predicated region
    $region42: #{encoder_forward.1} parent=1 // pred_check
      _
    $region43: #{encoder_forward.1} parent=1 // pred_check_branch
      %1147 = sbr.rel (0) target = $region45
    $region44: #{encoder_forward.1} parent=1 // pred_region
      _
    $region45: #{encoder_forward.1} parent=1 // pred_fallthru
      _
    // Predicated region
    $region46: #{encoder_forward.1} parent=1 // pred_check
      _
    $region47: #{encoder_forward.1} parent=1 // pred_check_branch
      %1149 = sbr.rel (0) target = $region49
    $region48: #{encoder_forward.1} parent=1 // pred_region
      _
    $region49: #{encoder_forward.1} parent=1 // pred_fallthru
      _
    %1150 = vsyncpa [#allocation4], 1

</llo_original>
